<compile_context>
chip_gen: v5e
topology: v5e:2x2
jax: 0.10.0
libtpu: 0.0.40
codegen_flags: <defaults>
</compile_context>

<pallas_src>
import math
import functools

import jax
import jax.numpy as jnp
import numpy as np
from jax.experimental import pallas as pl
from jax.experimental.pallas import tpu as pltpu


# ----------------------------------------------------------------------------
# Kernel: one ResidualAttentionBlock per grid step (batch_tile b, layer l).
#   x = x + ln_12(MHA(ln_1(x)))
#   x = x + ln_22(MLP(ln_2(x)))
# ----------------------------------------------------------------------------
def resblock_kernel(x_ref, mask_ref, w_in_ref, w_proj_ref, ln_ref, bias_ref,
                    out_ref, acc_ref, *, n_head):
    layer = pl.program_id(1)
    n_layers = pl.num_programs(1)

    N, D = x_ref.shape                    # N = Bt * S folded rows
    H = n_head
    hd = D // H
    scale = 1.0 / math.sqrt(hd)
    bf16, f32 = jnp.bfloat16, jnp.float32

    # Layer 0: load this batch tile's residual stream into the f32 accumulator
    # (resident across the sequential "arbitrary" layer axis).
    @pl.when(layer == 0)
    def _():
        acc_ref[...] = x_ref[...].astype(f32)

    def layer_norm(v, row):               # f32 LayerNorm, eps = 1e-5
        g = ln_ref[0, row:row + 1, :]     # (1, D)
        b = ln_ref[0, row + 1:row + 2, :]
        mu = jnp.mean(v, axis=-1, keepdims=True)
        var = jnp.mean(jnp.square(v - mu), axis=-1, keepdims=True)
        return (v - mu) * jax.lax.rsqrt(var + 1e-5) * g + b

    x = acc_ref[...]                      # (N, D) f32 residual stream

    # ---------------- attention branch: x += ln_12(MHA(ln_1(x))) ------------
    h = layer_norm(x, 0)                                              # ln_1
    qkv = jnp.dot(h.astype(bf16), w_in_ref[0, :, :3 * D],
                  preferred_element_type=f32) + bias_ref[0, :, :3 * D]  # (N, 3D)
    q = qkv[:, 0:D] * scale               # fold 1/sqrt(hd) into q once (review #4)
    mask = mask_ref[...]                  # (N, N) additive: 0 / -1e9 block-diagonal

    attn = jnp.zeros((N, D), f32)
    # Static head loop; every op stays 2-D -> no head-split relayouts (review #3).
    for head in range(H):
        lo, hi = head * hd, (head + 1) * hd
        q_h = q[:, lo:hi].astype(bf16)                                # (N, hd)
        k_h = qkv[:, D + lo:D + hi].astype(bf16)                      # (N, hd)
        v_h = qkv[:, 2 * D + lo:2 * D + hi].astype(bf16)              # (N, hd)
        # scores over all folded rows; cross-batch entries masked to -1e9
        s = jax.lax.dot_general(q_h, k_h, (((1,), (1,)), ((), ())),
                                preferred_element_type=f32)           # (N, N)
        s = s + mask
        s = s - jnp.max(s, axis=-1, keepdims=True)
        p = jnp.exp(s)
        p = p * pl.reciprocal(jnp.sum(p, axis=-1, keepdims=True), approx=True)
        ctx = jnp.dot(p.astype(bf16), v_h, preferred_element_type=f32)  # (N, hd)
        # out-projection folded per head: attn @ Wo == sum_h ctx_h @ Wo[lo:hi, :]
        wo_h = w_in_ref[0, lo:hi, 3 * D:4 * D]                        # (hd, D) bf16
        attn = attn + jnp.dot(ctx.astype(bf16), wo_h,
                              preferred_element_type=f32)
    attn = attn + bias_ref[0, :, 3 * D:4 * D]
    x = x + layer_norm(attn, 2)                                       # ln_12

    # ---------------- MLP branch: x += ln_22(MLP(ln_2(x))) ------------------
    h2 = layer_norm(x, 4)                                             # ln_2
    h2 = jnp.dot(h2.astype(bf16), w_in_ref[0, :, 4 * D:],
                 preferred_element_type=f32) + bias_ref[0, :, 4 * D:8 * D]  # (N, 4D)
    h2 = jnp.maximum(h2, 0.0)                                         # ReLU
    h2 = jnp.dot(h2.astype(bf16), w_proj_ref[0],
                 preferred_element_type=f32) + bias_ref[0, :, 8 * D:]       # (N, D)
    x = x + layer_norm(h2, 6)                                         # ln_22

    acc_ref[...] = x

    @pl.when(layer == n_layers - 1)
    def _():
        out_ref[...] = acc_ref[...].astype(out_ref.dtype)


# ----------------------------------------------------------------------------
# Wrapper: single pallas_call over grid (B // Bt, L); weights stacked on a
# leading layer axis and streamed per grid step.
# ----------------------------------------------------------------------------
def _vmem_limit_bytes():
    # ~75% of physical VMEM, capped at 100 MiB: ~96 MiB on v5e/v6e (128 MiB parts),
    # ~48 MiB on v7x (64 MiB per TC).  Falls back to a universally safe 48 MiB.
    try:
        cap = pltpu.get_tpu_info().vmem_capacity_bytes
        return min(int(cap * 3 // 4), 100 * 1024 * 1024)
    except Exception:
        return 48 * 1024 * 1024


def make_transformer_call(N, D, L, n_head, n_batch_tiles, out_dtype):
    x_spec = pl.BlockSpec((N, D), lambda b, l: (b, 0))      # resident across l
    mask_spec = pl.BlockSpec((N, N), lambda b, l: (0, 0))   # constant -> single DMA

    def layer_spec(*dims):
        return pl.BlockSpec((1,) + dims,
                            lambda b, l, _nd=len(dims): (l,) + (0,) * _nd)

    return pl.pallas_call(
        functools.partial(resblock_kernel, n_head=n_head),
        out_shape=jax.ShapeDtypeStruct((n_batch_tiles * N, D), out_dtype),
        grid=(n_batch_tiles, L),
        in_specs=[
            x_spec,
            mask_spec,
            layer_spec(D, 8 * D),      # w_in  = [Wqkv | Wo | Wfc]   bf16
            layer_spec(4 * D, D),      # w_proj                       bf16
            layer_spec(8, D),          # 8 LayerNorm vectors          f32
            layer_spec(1, 9 * D),      # [bqkv | bo | bfc | bproj]    f32
        ],
        out_specs=pl.BlockSpec((N, D), lambda b, l: (b, 0)),
        scratch_shapes=[pltpu.VMEM((N, D), jnp.float32)],
        compiler_params=pltpu.CompilerParams(
            dimension_semantics=("parallel", "arbitrary"),
            vmem_limit_bytes=_vmem_limit_bytes(),
        ),
    )


def transformer_forward(x, params, n_head, *, batch_tile=None):
    B, S, D = x.shape
    L = params["w_in"].shape[0]
    Bt = B if batch_tile is None else batch_tile
    assert B % Bt == 0 and D % n_head == 0
    assert Bt == B or (Bt * S) % 8 == 0
    N = Bt * S
    # Block-diagonal additive mask isolating batch elements inside the folded rows.
    # (If the module's optional attn_mask were provided, it would be added into each
    #  S x S diagonal block here.)
    mask = np.full((N, N), -1e9, np.float32)
    for i in range(Bt):
        mask[i * S:(i + 1) * S, i * S:(i + 1) * S] = 0.0
    call = make_transformer_call(N, D, L, n_head, B // Bt, x.dtype)
    out = call(x.reshape(B * S, D), jnp.asarray(mask),
               params["w_in"], params["w_proj"], params["ln"], params["bias"])
    return out.reshape(B, S, D)


# ----------------------------------------------------------------------------
# Pure-JAX f32 reference (same math as the PyTorch module in eval mode),
# reading the same packed/bf16-quantized parameters.
# ----------------------------------------------------------------------------
def ref_forward(x, params, n_head):
    def ln(v, w, b):
        mu = v.mean(-1, keepdims=True)
        var = ((v - mu) ** 2).mean(-1, keepdims=True)
        return (v - mu) / jnp.sqrt(var + 1e-5) * w + b

    f32 = jnp.float32
    B, S, D = x.shape
    hd = D // n_head
    L = params["w_in"].shape[0]
    x = x.astype(f32)
    for l in range(L):
        w_in = params["w_in"][l].astype(f32)
        w_proj = params["w_proj"][l].astype(f32)
        lnp = params["ln"][l]
        bias = params["bias"][l][0]
        wqkv, wo, wfc = w_in[:, :3 * D], w_in[:, 3 * D:4 * D], w_in[:, 4 * D:]
        bqkv, bo = bias[:3 * D], bias[3 * D:4 * D]
        bfc, bproj = bias[4 * D:8 * D], bias[8 * D:]

        h = ln(x, lnp[0], lnp[1])
        qkv = h @ wqkv + bqkv
        q, k, v = qkv[..., :D], qkv[..., D:2 * D], qkv[..., 2 * D:]
        q = q.reshape(B, S, n_head, hd).transpose(0, 2, 1, 3)
        k = k.reshape(B, S, n_head, hd).transpose(0, 2, 1, 3)
        v = v.reshape(B, S, n_head, hd).transpose(0, 2, 1, 3)
        sc = jnp.einsum("bhqd,bhkd->bhqk", q, k) / math.sqrt(hd)
        pmat = jax.nn.softmax(sc, axis=-1)
        a = jnp.einsum("bhqk,bhkd->bhqd", pmat, v)
        a = a.transpose(0, 2, 1, 3).reshape(B, S, D)
        a = a @ wo + bo
        x = x + ln(a, lnp[2], lnp[3])

        h2 = ln(x, lnp[4], lnp[5])
        h2 = jnp.maximum(h2 @ wfc + bfc, 0.0)
        h2 = h2 @ w_proj + bproj
        x = x + ln(h2, lnp[6], lnp[7])
    return x


# ----------------------------------------------------------------------------
# Deterministic parameter init, packed into the per-layer slabs the kernel reads:
#   w_in (L, D, 8D) bf16, w_proj (L, 4D, D) bf16, ln (L, 8, D) f32, bias (L, 1, 9D) f32
# Linear weights are stored pre-transposed (in_features x out_features).
# LN params are lightly randomized so the LN-parameter plumbing is exercised.
# ----------------------------------------------------------------------------
def init_params(key, L, D):
    f32, bf16 = jnp.float32, jnp.bfloat16
    s = 0.02
    layer_keys = jax.random.split(key, L)

    def one_layer(k):
        ks = jax.random.split(k, 14)
        wqkv = (s * jax.random.normal(ks[0], (D, 3 * D), f32)).astype(bf16)
        wo = (s * jax.random.normal(ks[2], (D, D), f32)).astype(bf16)
        wfc = (s * jax.random.normal(ks[3], (D, 4 * D), f32)).astype(bf16)
        wproj = (s * jax.random.normal(ks[5], (4 * D, D), f32)).astype(bf16)
        bqkv = s * jax.random.normal(ks[1], (3 * D,), f32)
        bo = jnp.zeros((D,), f32)
        bfc = s * jax.random.normal(ks[4], (4 * D,), f32)
        bproj = jnp.zeros((D,), f32)
        ln_rows = jnp.stack([
            1.0 + 0.1 * jax.random.normal(ks[6], (D,), f32),    # ln1_w
            0.1 * jax.random.normal(ks[7], (D,), f32),          # ln1_b
            1.0 + 0.1 * jax.random.normal(ks[8], (D,), f32),    # ln12_w
            0.1 * jax.random.normal(ks[9], (D,), f32),          # ln12_b
            1.0 + 0.1 * jax.random.normal(ks[10], (D,), f32),   # ln2_w
            0.1 * jax.random.normal(ks[11], (D,), f32),         # ln2_b
            1.0 + 0.1 * jax.random.normal(ks[12], (D,), f32),   # ln22_w
            0.1 * jax.random.normal(ks[13], (D,), f32),         # ln22_b
        ], axis=0)
        return dict(
            w_in=jnp.concatenate([wqkv, wo, wfc], axis=1),               # (D, 8D)
            w_proj=wproj,                                                # (4D, D)
            ln=ln_rows,                                                  # (8, D)
            bias=jnp.concatenate([bqkv, bo, bfc, bproj])[None, :],       # (1, 9D)
        )

    per_layer = [one_layer(layer_keys[i]) for i in range(L)]
    return {k: jnp.stack([p[k] for p in per_layer], axis=0)
            for k in per_layer[0]}


if __name__ == "__main__":
    B, S, D = 2, 8, 128          # batch, seq, width (D lane-dense)
    HEADS, LAYERS = 4, 2

    key = jax.random.PRNGKey(0)
    kx, kp = jax.random.split(key)
    x = jax.random.normal(kx, (B, S, D), jnp.float32)
    params = init_params(kp, LAYERS, D)

    out = jax.block_until_ready(transformer_forward(x, params, HEADS))
    ref = jax.block_until_ready(ref_forward(x, params, HEADS))

    assert out.shape == (B, S, D)
    # Matmuls use bf16 inputs (f32 accumulation) and the softmax reciprocal is the
    # approximate EUP one, so compare to the f32 reference with a loose tolerance
    # (structural errors would be O(1)).
    np.testing.assert_allclose(np.asarray(out), np.asarray(ref),
                               atol=5e-2, rtol=5e-2)
    print("KERNEL_OK")
</pallas_src>

<mosaic_0001>
module attributes {stable_mosaic.version = 11 : i64} {
  func.func @resblock_kernel(%arg0: i32, %arg1: i32, %arg2: memref<16x128xf32, #tpu.memory_space<vmem>>, %arg3: memref<16x16xf32, #tpu.memory_space<vmem>>, %arg4: memref<1x128x1024xbf16, #tpu.memory_space<vmem>>, %arg5: memref<1x512x128xbf16, #tpu.memory_space<vmem>>, %arg6: memref<1x8x128xf32, #tpu.memory_space<vmem>>, %arg7: memref<1x1x1152xf32, #tpu.memory_space<vmem>>, %arg8: memref<16x128xf32, #tpu.memory_space<vmem>>, %arg9: memref<16x128xf32, #tpu.memory_space<vmem>>) attributes {dimension_semantics = [#tpu.dimension_semantics<parallel>, #tpu.dimension_semantics<arbitrary>], iteration_bounds = array<i64: 1, 2>, scalar_prefetch = 0 : i64, scratch_operands = 1 : i64, tpu.core_type = #tpu.core_type<tc>, window_params = [{transform_indices = @transform_0, window_bounds = array<i64: 16, 128>}, {pipeline_mode = #tpu.pipeline_mode<synchronous>, transform_indices = @transform_1, window_bounds = array<i64: 16, 16>}, {transform_indices = @transform_2, window_bounds = array<i64: 1, 128, 1024>}, {transform_indices = @transform_3, window_bounds = array<i64: 1, 512, 128>}, {transform_indices = @transform_4, window_bounds = array<i64: 1, 8, 128>}, {transform_indices = @transform_5, window_bounds = array<i64: 1, 1, 1152>}, {transform_indices = @transform_6, window_bounds = array<i64: 16, 128>}]} {
    %c0_i32 = arith.constant 0 : i32
    %0 = arith.cmpi eq, %arg1, %c0_i32 : i32
    %1 = arith.extui %0 : i1 to i32
    %c0_i32_0 = arith.constant 0 : i32
    %2 = arith.cmpi ne, %1, %c0_i32_0 : i32
    scf.if %2 {
      %c0_96 = arith.constant 0 : index
      %c0_97 = arith.constant 0 : index
      %249 = vector.load %arg2[%c0_96, %c0_97] : memref<16x128xf32, #tpu.memory_space<vmem>>, vector<16x128xf32>
      %c0_98 = arith.constant 0 : index
      %c0_99 = arith.constant 0 : index
      %250 = vector.load %arg9[%c0_98, %c0_99] : memref<16x128xf32, #tpu.memory_space<vmem>>, vector<16x128xf32>
      tpu.vector_store %arg9[%c0_98, %c0_99], %249 {strides = array<i32>} : memref<16x128xf32, #tpu.memory_space<vmem>>, vector<16x128xf32>,
    } else {
    }
    %c0 = arith.constant 0 : index
    %c0_1 = arith.constant 0 : index
    %3 = vector.load %arg9[%c0, %c0_1] : memref<16x128xf32, #tpu.memory_space<vmem>>, vector<16x128xf32>
    %c0_2 = arith.constant 0 : index
    %c0_3 = arith.constant 0 : index
    %c0_4 = arith.constant 0 : index
    %4 = vector.load %arg6[%c0_2, %c0_3, %c0_4] : memref<1x8x128xf32, #tpu.memory_space<vmem>>, vector<1x1x128xf32>
    %5 = vector.shape_cast %4 : vector<1x1x128xf32> to vector<1x128xf32>
    %c0_5 = arith.constant 0 : index
    %c1 = arith.constant 1 : index
    %c0_6 = arith.constant 0 : index
    %6 = vector.load %arg6[%c0_5, %c1, %c0_6] : memref<1x8x128xf32, #tpu.memory_space<vmem>>, vector<1x1x128xf32>
    %7 = vector.shape_cast %6 : vector<1x1x128xf32> to vector<1x128xf32>
    %cst = arith.constant dense<0.000000e+00> : vector<16xf32>
    %8 = vector.multi_reduction <add>, %3, %cst [1] : vector<16x128xf32> to vector<16xf32>
    %9 = vector.shape_cast %8 : vector<16xf32> to vector<16x1xf32>
    %cst_7 = arith.constant 1.280000e+02 : f32
    %10 = vector.broadcast %cst_7 : f32 to vector<16x1xf32>
    %11 = arith.divf %9, %10 : vector<16x1xf32>
    %12 = vector.broadcast %11 : vector<16x1xf32> to vector<16x128xf32>
    %13 = arith.subf %3, %12 : vector<16x128xf32>
    %14 = arith.mulf %13, %13 : vector<16x128xf32>
    %cst_8 = arith.constant dense<0.000000e+00> : vector<16xf32>
    %15 = vector.multi_reduction <add>, %14, %cst_8 [1] : vector<16x128xf32> to vector<16xf32>
    %16 = vector.shape_cast %15 : vector<16xf32> to vector<16x1xf32>
    %cst_9 = arith.constant 1.280000e+02 : f32
    %17 = vector.broadcast %cst_9 : f32 to vector<16x1xf32>
    %18 = arith.divf %16, %17 : vector<16x1xf32>
    %19 = vector.broadcast %11 : vector<16x1xf32> to vector<16x128xf32>
    %20 = arith.subf %3, %19 : vector<16x128xf32>
    %cst_10 = arith.constant 9.99999974E-6 : f32
    %21 = vector.broadcast %cst_10 : f32 to vector<16x1xf32>
    %22 = arith.addf %18, %21 : vector<16x1xf32>
    %23 = math.rsqrt %22 : vector<16x1xf32>
    %24 = vector.broadcast %23 : vector<16x1xf32> to vector<16x128xf32>
    %25 = arith.mulf %20, %24 : vector<16x128xf32>
    %26 = vector.broadcast %5 : vector<1x128xf32> to vector<16x128xf32>
    %27 = arith.mulf %25, %26 : vector<16x128xf32>
    %28 = vector.broadcast %7 : vector<1x128xf32> to vector<16x128xf32>
    %29 = arith.addf %27, %28 : vector<16x128xf32>
    %30 = arith.truncf %29 : vector<16x128xf32> to vector<16x128xbf16>
    %c0_11 = arith.constant 0 : index
    %c0_12 = arith.constant 0 : index
    %c0_13 = arith.constant 0 : index
    %31 = vector.load %arg4[%c0_11, %c0_12, %c0_13] : memref<1x128x1024xbf16, #tpu.memory_space<vmem>>, vector<1x128x384xbf16>
    %32 = vector.shape_cast %31 : vector<1x128x384xbf16> to vector<128x384xbf16>
    %cst_14 = arith.constant dense<0.000000e+00> : vector<16x384xf32>
    %33 = tpu.matmul %30, %32, %cst_14 {dimension_numbers = #tpu.dot_dimension_numbers<[1], [0], [0], [1], [0, 0, 1, 1], [], []>} : vector<16x128xbf16>, vector<128x384xbf16>, vector<16x384xf32> -> vector<16x384xf32>
    %c0_15 = arith.constant 0 : index
    %c0_16 = arith.constant 0 : index
    %c0_17 = arith.constant 0 : index
    %34 = vector.load %arg7[%c0_15, %c0_16, %c0_17] : memref<1x1x1152xf32, #tpu.memory_space<vmem>>, vector<1x1x384xf32>
    %35 = vector.shape_cast %34 : vector<1x1x384xf32> to vector<1x384xf32>
    %36 = vector.broadcast %35 : vector<1x384xf32> to vector<16x384xf32>
    %37 = arith.addf %33, %36 : vector<16x384xf32>
    %38 = vector.extract_strided_slice %37 {offsets = [0, 0], sizes = [16, 128], strides = [1, 1]} : vector<16x384xf32> to vector<16x128xf32>
    %cst_18 = arith.constant 0.176776692 : f32
    %39 = vector.broadcast %cst_18 : f32 to vector<16x128xf32>
    %40 = arith.mulf %38, %39 : vector<16x128xf32>
    %c0_19 = arith.constant 0 : index
    %c0_20 = arith.constant 0 : index
    %41 = vector.load %arg3[%c0_19, %c0_20] : memref<16x16xf32, #tpu.memory_space<vmem>>, vector<16x16xf32>
    %cst_21 = arith.constant 0.000000e+00 : f32
    %42 = vector.broadcast %cst_21 : f32 to vector<16x128xf32>
    %43 = vector.extract_strided_slice %40 {offsets = [0, 0], sizes = [16, 32], strides = [1, 1]} : vector<16x128xf32> to vector<16x32xf32>
    %44 = arith.truncf %43 : vector<16x32xf32> to vector<16x32xbf16>
    %45 = vector.extract_strided_slice %37 {offsets = [0, 128], sizes = [16, 32], strides = [1, 1]} : vector<16x384xf32> to vector<16x32xf32>
    %46 = arith.truncf %45 : vector<16x32xf32> to vector<16x32xbf16>
    %47 = vector.extract_strided_slice %37 {offsets = [0, 256], sizes = [16, 32], strides = [1, 1]} : vector<16x384xf32> to vector<16x32xf32>
    %48 = arith.truncf %47 : vector<16x32xf32> to vector<16x32xbf16>
    %cst_22 = arith.constant dense<0.000000e+00> : vector<16x16xf32>
    %49 = tpu.matmul %44, %46, %cst_22 {dimension_numbers = #tpu.dot_dimension_numbers<[1], [1], [0], [0], [0, 0, 1, 0], [], []>} : vector<16x32xbf16>, vector<16x32xbf16>, vector<16x16xf32> -> vector<16x16xf32>
    %50 = arith.addf %49, %41 : vector<16x16xf32>
    %cst_23 = arith.constant dense<0xFF800000> : vector<16xf32>
    %51 = vector.multi_reduction <maximumf>, %50, %cst_23 [1] : vector<16x16xf32> to vector<16xf32>
    %52 = vector.shape_cast %51 : vector<16xf32> to vector<16x1xf32>
    %53 = vector.broadcast %52 : vector<16x1xf32> to vector<16x16xf32>
    %54 = arith.subf %50, %53 : vector<16x16xf32>
    %55 = math.exp %54 : vector<16x16xf32>
    %cst_24 = arith.constant dense<0.000000e+00> : vector<16xf32>
    %56 = vector.multi_reduction <add>, %55, %cst_24 [1] : vector<16x16xf32> to vector<16xf32>
    %57 = vector.shape_cast %56 : vector<16xf32> to vector<16x1xf32>
    %58 = tpu.reciprocal %57 {approx = true} : vector<16x1xf32> -> vector<16x1xf32>
    %59 = vector.broadcast %58 : vector<16x1xf32> to vector<16x16xf32>
    %60 = arith.mulf %55, %59 : vector<16x16xf32>
    %61 = arith.truncf %60 : vector<16x16xf32> to vector<16x16xbf16>
    %cst_25 = arith.constant dense<0.000000e+00> : vector<16x32xf32>
    %62 = tpu.matmul %61, %48, %cst_25 {dimension_numbers = #tpu.dot_dimension_numbers<[1], [0], [0], [1], [0, 0, 1, 1], [], []>} : vector<16x16xbf16>, vector<16x32xbf16>, vector<16x32xf32> -> vector<16x32xf32>
    %c0_26 = arith.constant 0 : index
    %c0_27 = arith.constant 0 : index
    %c384 = arith.constant 384 : index
    %63 = vector.load %arg4[%c0_26, %c0_27, %c384] : memref<1x128x1024xbf16, #tpu.memory_space<vmem>>, vector<1x32x128xbf16>
    %64 = vector.shape_cast %63 : vector<1x32x128xbf16> to vector<32x128xbf16>
    %65 = arith.truncf %62 : vector<16x32xf32> to vector<16x32xbf16>
    %cst_28 = arith.constant dense<0.000000e+00> : vector<16x128xf32>
    %66 = tpu.matmul %65, %64, %cst_28 {dimension_numbers = #tpu.dot_dimension_numbers<[1], [0], [0], [1], [0, 0, 1, 1], [], []>} : vector<16x32xbf16>, vector<32x128xbf16>, vector<16x128xf32> -> vector<16x128xf32>
    %67 = arith.addf %42, %66 : vector<16x128xf32>
    %68 = vector.extract_strided_slice %40 {offsets = [0, 32], sizes = [16, 32], strides = [1, 1]} : vector<16x128xf32> to vector<16x32xf32>
    %69 = arith.truncf %68 : vector<16x32xf32> to vector<16x32xbf16>
    %70 = vector.extract_strided_slice %37 {offsets = [0, 160], sizes = [16, 32], strides = [1, 1]} : vector<16x384xf32> to vector<16x32xf32>
    %71 = arith.truncf %70 : vector<16x32xf32> to vector<16x32xbf16>
    %72 = vector.extract_strided_slice %37 {offsets = [0, 288], sizes = [16, 32], strides = [1, 1]} : vector<16x384xf32> to vector<16x32xf32>
    %73 = arith.truncf %72 : vector<16x32xf32> to vector<16x32xbf16>
    %cst_29 = arith.constant dense<0.000000e+00> : vector<16x16xf32>
    %74 = tpu.matmul %69, %71, %cst_29 {dimension_numbers = #tpu.dot_dimension_numbers<[1], [1], [0], [0], [0, 0, 1, 0], [], []>} : vector<16x32xbf16>, vector<16x32xbf16>, vector<16x16xf32> -> vector<16x16xf32>
    %75 = arith.addf %74, %41 : vector<16x16xf32>
    %cst_30 = arith.constant dense<0xFF800000> : vector<16xf32>
    %76 = vector.multi_reduction <maximumf>, %75, %cst_30 [1] : vector<16x16xf32> to vector<16xf32>
    %77 = vector.shape_cast %76 : vector<16xf32> to vector<16x1xf32>
    %78 = vector.broadcast %77 : vector<16x1xf32> to vector<16x16xf32>
    %79 = arith.subf %75, %78 : vector<16x16xf32>
    %80 = math.exp %79 : vector<16x16xf32>
    %cst_31 = arith.constant dense<0.000000e+00> : vector<16xf32>
    %81 = vector.multi_reduction <add>, %80, %cst_31 [1] : vector<16x16xf32> to vector<16xf32>
    %82 = vector.shape_cast %81 : vector<16xf32> to vector<16x1xf32>
    %83 = tpu.reciprocal %82 {approx = true} : vector<16x1xf32> -> vector<16x1xf32>
    %84 = vector.broadcast %83 : vector<16x1xf32> to vector<16x16xf32>
    %85 = arith.mulf %80, %84 : vector<16x16xf32>
    %86 = arith.truncf %85 : vector<16x16xf32> to vector<16x16xbf16>
    %cst_32 = arith.constant dense<0.000000e+00> : vector<16x32xf32>
    %87 = tpu.matmul %86, %73, %cst_32 {dimension_numbers = #tpu.dot_dimension_numbers<[1], [0], [0], [1], [0, 0, 1, 1], [], []>} : vector<16x16xbf16>, vector<16x32xbf16>, vector<16x32xf32> -> vector<16x32xf32>
    %c0_33 = arith.constant 0 : index
    %c32 = arith.constant 32 : index
    %c384_34 = arith.constant 384 : index
    %88 = vector.load %arg4[%c0_33, %c32, %c384_34] : memref<1x128x1024xbf16, #tpu.memory_space<vmem>>, vector<1x32x128xbf16>
    %89 = vector.shape_cast %88 : vector<1x32x128xbf16> to vector<32x128xbf16>
    %90 = arith.truncf %87 : vector<16x32xf32> to vector<16x32xbf16>
    %cst_35 = arith.constant dense<0.000000e+00> : vector<16x128xf32>
    %91 = tpu.matmul %90, %89, %cst_35 {dimension_numbers = #tpu.dot_dimension_numbers<[1], [0], [0], [1], [0, 0, 1, 1], [], []>} : vector<16x32xbf16>, vector<32x128xbf16>, vector<16x128xf32> -> vector<16x128xf32>
    %92 = arith.addf %67, %91 : vector<16x128xf32>
    %93 = vector.extract_strided_slice %40 {offsets = [0, 64], sizes = [16, 32], strides = [1, 1]} : vector<16x128xf32> to vector<16x32xf32>
    %94 = arith.truncf %93 : vector<16x32xf32> to vector<16x32xbf16>
    %95 = vector.extract_strided_slice %37 {offsets = [0, 192], sizes = [16, 32], strides = [1, 1]} : vector<16x384xf32> to vector<16x32xf32>
    %96 = arith.truncf %95 : vector<16x32xf32> to vector<16x32xbf16>
    %97 = vector.extract_strided_slice %37 {offsets = [0, 320], sizes = [16, 32], strides = [1, 1]} : vector<16x384xf32> to vector<16x32xf32>
    %98 = arith.truncf %97 : vector<16x32xf32> to vector<16x32xbf16>
    %cst_36 = arith.constant dense<0.000000e+00> : vector<16x16xf32>
    %99 = tpu.matmul %94, %96, %cst_36 {dimension_numbers = #tpu.dot_dimension_numbers<[1], [1], [0], [0], [0, 0, 1, 0], [], []>} : vector<16x32xbf16>, vector<16x32xbf16>, vector<16x16xf32> -> vector<16x16xf32>
    %100 = arith.addf %99, %41 : vector<16x16xf32>
    %cst_37 = arith.constant dense<0xFF800000> : vector<16xf32>
    %101 = vector.multi_reduction <maximumf>, %100, %cst_37 [1] : vector<16x16xf32> to vector<16xf32>
    %102 = vector.shape_cast %101 : vector<16xf32> to vector<16x1xf32>
    %103 = vector.broadcast %102 : vector<16x1xf32> to vector<16x16xf32>
    %104 = arith.subf %100, %103 : vector<16x16xf32>
    %105 = math.exp %104 : vector<16x16xf32>
    %cst_38 = arith.constant dense<0.000000e+00> : vector<16xf32>
    %106 = vector.multi_reduction <add>, %105, %cst_38 [1] : vector<16x16xf32> to vector<16xf32>
    %107 = vector.shape_cast %106 : vector<16xf32> to vector<16x1xf32>
    %108 = tpu.reciprocal %107 {approx = true} : vector<16x1xf32> -> vector<16x1xf32>
    %109 = vector.broadcast %108 : vector<16x1xf32> to vector<16x16xf32>
    %110 = arith.mulf %105, %109 : vector<16x16xf32>
    %111 = arith.truncf %110 : vector<16x16xf32> to vector<16x16xbf16>
    %cst_39 = arith.constant dense<0.000000e+00> : vector<16x32xf32>
    %112 = tpu.matmul %111, %98, %cst_39 {dimension_numbers = #tpu.dot_dimension_numbers<[1], [0], [0], [1], [0, 0, 1, 1], [], []>} : vector<16x16xbf16>, vector<16x32xbf16>, vector<16x32xf32> -> vector<16x32xf32>
    %c0_40 = arith.constant 0 : index
    %c64 = arith.constant 64 : index
    %c384_41 = arith.constant 384 : index
    %113 = vector.load %arg4[%c0_40, %c64, %c384_41] : memref<1x128x1024xbf16, #tpu.memory_space<vmem>>, vector<1x32x128xbf16>
    %114 = vector.shape_cast %113 : vector<1x32x128xbf16> to vector<32x128xbf16>
    %115 = arith.truncf %112 : vector<16x32xf32> to vector<16x32xbf16>
    %cst_42 = arith.constant dense<0.000000e+00> : vector<16x128xf32>
    %116 = tpu.matmul %115, %114, %cst_42 {dimension_numbers = #tpu.dot_dimension_numbers<[1], [0], [0], [1], [0, 0, 1, 1], [], []>} : vector<16x32xbf16>, vector<32x128xbf16>, vector<16x128xf32> -> vector<16x128xf32>
    %117 = arith.addf %92, %116 : vector<16x128xf32>
    %118 = vector.extract_strided_slice %40 {offsets = [0, 96], sizes = [16, 32], strides = [1, 1]} : vector<16x128xf32> to vector<16x32xf32>
    %119 = arith.truncf %118 : vector<16x32xf32> to vector<16x32xbf16>
    %120 = vector.extract_strided_slice %37 {offsets = [0, 224], sizes = [16, 32], strides = [1, 1]} : vector<16x384xf32> to vector<16x32xf32>
    %121 = arith.truncf %120 : vector<16x32xf32> to vector<16x32xbf16>
    %122 = vector.extract_strided_slice %37 {offsets = [0, 352], sizes = [16, 32], strides = [1, 1]} : vector<16x384xf32> to vector<16x32xf32>
    %123 = arith.truncf %122 : vector<16x32xf32> to vector<16x32xbf16>
    %cst_43 = arith.constant dense<0.000000e+00> : vector<16x16xf32>
    %124 = tpu.matmul %119, %121, %cst_43 {dimension_numbers = #tpu.dot_dimension_numbers<[1], [1], [0], [0], [0, 0, 1, 0], [], []>} : vector<16x32xbf16>, vector<16x32xbf16>, vector<16x16xf32> -> vector<16x16xf32>
    %125 = arith.addf %124, %41 : vector<16x16xf32>
    %cst_44 = arith.constant dense<0xFF800000> : vector<16xf32>
    %126 = vector.multi_reduction <maximumf>, %125, %cst_44 [1] : vector<16x16xf32> to vector<16xf32>
    %127 = vector.shape_cast %126 : vector<16xf32> to vector<16x1xf32>
    %128 = vector.broadcast %127 : vector<16x1xf32> to vector<16x16xf32>
    %129 = arith.subf %125, %128 : vector<16x16xf32>
    %130 = math.exp %129 : vector<16x16xf32>
    %cst_45 = arith.constant dense<0.000000e+00> : vector<16xf32>
    %131 = vector.multi_reduction <add>, %130, %cst_45 [1] : vector<16x16xf32> to vector<16xf32>
    %132 = vector.shape_cast %131 : vector<16xf32> to vector<16x1xf32>
    %133 = tpu.reciprocal %132 {approx = true} : vector<16x1xf32> -> vector<16x1xf32>
    %134 = vector.broadcast %133 : vector<16x1xf32> to vector<16x16xf32>
    %135 = arith.mulf %130, %134 : vector<16x16xf32>
    %136 = arith.truncf %135 : vector<16x16xf32> to vector<16x16xbf16>
    %cst_46 = arith.constant dense<0.000000e+00> : vector<16x32xf32>
    %137 = tpu.matmul %136, %123, %cst_46 {dimension_numbers = #tpu.dot_dimension_numbers<[1], [0], [0], [1], [0, 0, 1, 1], [], []>} : vector<16x16xbf16>, vector<16x32xbf16>, vector<16x32xf32> -> vector<16x32xf32>
    %c0_47 = arith.constant 0 : index
    %c96 = arith.constant 96 : index
    %c384_48 = arith.constant 384 : index
    %138 = vector.load %arg4[%c0_47, %c96, %c384_48] : memref<1x128x1024xbf16, #tpu.memory_space<vmem>>, vector<1x32x128xbf16>
    %139 = vector.shape_cast %138 : vector<1x32x128xbf16> to vector<32x128xbf16>
    %140 = arith.truncf %137 : vector<16x32xf32> to vector<16x32xbf16>
    %cst_49 = arith.constant dense<0.000000e+00> : vector<16x128xf32>
    %141 = tpu.matmul %140, %139, %cst_49 {dimension_numbers = #tpu.dot_dimension_numbers<[1], [0], [0], [1], [0, 0, 1, 1], [], []>} : vector<16x32xbf16>, vector<32x128xbf16>, vector<16x128xf32> -> vector<16x128xf32>
    %142 = arith.addf %117, %141 : vector<16x128xf32>
    %c0_50 = arith.constant 0 : index
    %c0_51 = arith.constant 0 : index
    %c384_52 = arith.constant 384 : index
    %143 = vector.load %arg7[%c0_50, %c0_51, %c384_52] : memref<1x1x1152xf32, #tpu.memory_space<vmem>>, vector<1x1x128xf32>
    %144 = vector.shape_cast %143 : vector<1x1x128xf32> to vector<1x128xf32>
    %145 = vector.broadcast %144 : vector<1x128xf32> to vector<16x128xf32>
    %146 = arith.addf %142, %145 : vector<16x128xf32>
    %c0_53 = arith.constant 0 : index
    %c2 = arith.constant 2 : index
    %c0_54 = arith.constant 0 : index
    %147 = vector.load %arg6[%c0_53, %c2, %c0_54] : memref<1x8x128xf32, #tpu.memory_space<vmem>>, vector<1x1x128xf32>
    %148 = vector.shape_cast %147 : vector<1x1x128xf32> to vector<1x128xf32>
    %c0_55 = arith.constant 0 : index
    %c3 = arith.constant 3 : index
    %c0_56 = arith.constant 0 : index
    %149 = vector.load %arg6[%c0_55, %c3, %c0_56] : memref<1x8x128xf32, #tpu.memory_space<vmem>>, vector<1x1x128xf32>
    %150 = vector.shape_cast %149 : vector<1x1x128xf32> to vector<1x128xf32>
    %cst_57 = arith.constant dense<0.000000e+00> : vector<16xf32>
    %151 = vector.multi_reduction <add>, %146, %cst_57 [1] : vector<16x128xf32> to vector<16xf32>
    %152 = vector.shape_cast %151 : vector<16xf32> to vector<16x1xf32>
    %cst_58 = arith.constant 1.280000e+02 : f32
    %153 = vector.broadcast %cst_58 : f32 to vector<16x1xf32>
    %154 = arith.divf %152, %153 : vector<16x1xf32>
    %155 = vector.broadcast %154 : vector<16x1xf32> to vector<16x128xf32>
    %156 = arith.subf %146, %155 : vector<16x128xf32>
    %157 = arith.mulf %156, %156 : vector<16x128xf32>
    %cst_59 = arith.constant dense<0.000000e+00> : vector<16xf32>
    %158 = vector.multi_reduction <add>, %157, %cst_59 [1] : vector<16x128xf32> to vector<16xf32>
    %159 = vector.shape_cast %158 : vector<16xf32> to vector<16x1xf32>
    %cst_60 = arith.constant 1.280000e+02 : f32
    %160 = vector.broadcast %cst_60 : f32 to vector<16x1xf32>
    %161 = arith.divf %159, %160 : vector<16x1xf32>
    %162 = vector.broadcast %154 : vector<16x1xf32> to vector<16x128xf32>
    %163 = arith.subf %146, %162 : vector<16x128xf32>
    %cst_61 = arith.constant 9.99999974E-6 : f32
    %164 = vector.broadcast %cst_61 : f32 to vector<16x1xf32>
    %165 = arith.addf %161, %164 : vector<16x1xf32>
    %166 = math.rsqrt %165 : vector<16x1xf32>
    %167 = vector.broadcast %166 : vector<16x1xf32> to vector<16x128xf32>
    %168 = arith.mulf %163, %167 : vector<16x128xf32>
    %169 = vector.broadcast %148 : vector<1x128xf32> to vector<16x128xf32>
    %170 = arith.mulf %168, %169 : vector<16x128xf32>
    %171 = vector.broadcast %150 : vector<1x128xf32> to vector<16x128xf32>
    %172 = arith.addf %170, %171 : vector<16x128xf32>
    %173 = arith.addf %3, %172 : vector<16x128xf32>
    %c0_62 = arith.constant 0 : index
    %c4 = arith.constant 4 : index
    %c0_63 = arith.constant 0 : index
    %174 = vector.load %arg6[%c0_62, %c4, %c0_63] : memref<1x8x128xf32, #tpu.memory_space<vmem>>, vector<1x1x128xf32>
    %175 = vector.shape_cast %174 : vector<1x1x128xf32> to vector<1x128xf32>
    %c0_64 = arith.constant 0 : index
    %c5 = arith.constant 5 : index
    %c0_65 = arith.constant 0 : index
    %176 = vector.load %arg6[%c0_64, %c5, %c0_65] : memref<1x8x128xf32, #tpu.memory_space<vmem>>, vector<1x1x128xf32>
    %177 = vector.shape_cast %176 : vector<1x1x128xf32> to vector<1x128xf32>
    %cst_66 = arith.constant dense<0.000000e+00> : vector<16xf32>
    %178 = vector.multi_reduction <add>, %173, %cst_66 [1] : vector<16x128xf32> to vector<16xf32>
    %179 = vector.shape_cast %178 : vector<16xf32> to vector<16x1xf32>
    %cst_67 = arith.constant 1.280000e+02 : f32
    %180 = vector.broadcast %cst_67 : f32 to vector<16x1xf32>
    %181 = arith.divf %179, %180 : vector<16x1xf32>
    %182 = vector.broadcast %181 : vector<16x1xf32> to vector<16x128xf32>
    %183 = arith.subf %173, %182 : vector<16x128xf32>
    %184 = arith.mulf %183, %183 : vector<16x128xf32>
    %cst_68 = arith.constant dense<0.000000e+00> : vector<16xf32>
    %185 = vector.multi_reduction <add>, %184, %cst_68 [1] : vector<16x128xf32> to vector<16xf32>
    %186 = vector.shape_cast %185 : vector<16xf32> to vector<16x1xf32>
    %cst_69 = arith.constant 1.280000e+02 : f32
    %187 = vector.broadcast %cst_69 : f32 to vector<16x1xf32>
    %188 = arith.divf %186, %187 : vector<16x1xf32>
    %189 = vector.broadcast %181 : vector<16x1xf32> to vector<16x128xf32>
    %190 = arith.subf %173, %189 : vector<16x128xf32>
    %cst_70 = arith.constant 9.99999974E-6 : f32
    %191 = vector.broadcast %cst_70 : f32 to vector<16x1xf32>
    %192 = arith.addf %188, %191 : vector<16x1xf32>
    %193 = math.rsqrt %192 : vector<16x1xf32>
    %194 = vector.broadcast %193 : vector<16x1xf32> to vector<16x128xf32>
    %195 = arith.mulf %190, %194 : vector<16x128xf32>
    %196 = vector.broadcast %175 : vector<1x128xf32> to vector<16x128xf32>
    %197 = arith.mulf %195, %196 : vector<16x128xf32>
    %198 = vector.broadcast %177 : vector<1x128xf32> to vector<16x128xf32>
    %199 = arith.addf %197, %198 : vector<16x128xf32>
    %200 = arith.truncf %199 : vector<16x128xf32> to vector<16x128xbf16>
    %c0_71 = arith.constant 0 : index
    %c0_72 = arith.constant 0 : index
    %c512 = arith.constant 512 : index
    %201 = vector.load %arg4[%c0_71, %c0_72, %c512] : memref<1x128x1024xbf16, #tpu.memory_space<vmem>>, vector<1x128x512xbf16>
    %202 = vector.shape_cast %201 : vector<1x128x512xbf16> to vector<128x512xbf16>
    %cst_73 = arith.constant dense<0.000000e+00> : vector<16x512xf32>
    %203 = tpu.matmul %200, %202, %cst_73 {dimension_numbers = #tpu.dot_dimension_numbers<[1], [0], [0], [1], [0, 0, 1, 1], [], []>} : vector<16x128xbf16>, vector<128x512xbf16>, vector<16x512xf32> -> vector<16x512xf32>
    %c0_74 = arith.constant 0 : index
    %c0_75 = arith.constant 0 : index
    %c512_76 = arith.constant 512 : index
    %204 = vector.load %arg7[%c0_74, %c0_75, %c512_76] : memref<1x1x1152xf32, #tpu.memory_space<vmem>>, vector<1x1x512xf32>
    %205 = vector.shape_cast %204 : vector<1x1x512xf32> to vector<1x512xf32>
    %206 = vector.broadcast %205 : vector<1x512xf32> to vector<16x512xf32>
    %207 = arith.addf %203, %206 : vector<16x512xf32>
    %cst_77 = arith.constant 0.000000e+00 : f32
    %208 = vector.broadcast %cst_77 : f32 to vector<16x512xf32>
    %209 = arith.maximumf %207, %208 : vector<16x512xf32>
    %210 = arith.truncf %209 : vector<16x512xf32> to vector<16x512xbf16>
    %c0_78 = arith.constant 0 : index
    %c0_79 = arith.constant 0 : index
    %c0_80 = arith.constant 0 : index
    %211 = vector.load %arg5[%c0_78, %c0_79, %c0_80] : memref<1x512x128xbf16, #tpu.memory_space<vmem>>, vector<1x512x128xbf16>
    %212 = vector.shape_cast %211 : vector<1x512x128xbf16> to vector<512x128xbf16>
    %cst_81 = arith.constant dense<0.000000e+00> : vector<16x128xf32>
    %213 = tpu.matmul %210, %212, %cst_81 {dimension_numbers = #tpu.dot_dimension_numbers<[1], [0], [0], [1], [0, 0, 1, 1], [], []>} : vector<16x512xbf16>, vector<512x128xbf16>, vector<16x128xf32> -> vector<16x128xf32>
    %c0_82 = arith.constant 0 : index
    %c0_83 = arith.constant 0 : index
    %c1024 = arith.constant 1024 : index
    %214 = vector.load %arg7[%c0_82, %c0_83, %c1024] : memref<1x1x1152xf32, #tpu.memory_space<vmem>>, vector<1x1x128xf32>
    %215 = vector.shape_cast %214 : vector<1x1x128xf32> to vector<1x128xf32>
    %216 = vector.broadcast %215 : vector<1x128xf32> to vector<16x128xf32>
    %217 = arith.addf %213, %216 : vector<16x128xf32>
    %c0_84 = arith.constant 0 : index
    %c6 = arith.constant 6 : index
    %c0_85 = arith.constant 0 : index
    %218 = vector.load %arg6[%c0_84, %c6, %c0_85] : memref<1x8x128xf32, #tpu.memory_space<vmem>>, vector<1x1x128xf32>
    %219 = vector.shape_cast %218 : vector<1x1x128xf32> to vector<1x128xf32>
    %c0_86 = arith.constant 0 : index
    %c7 = arith.constant 7 : index
    %c0_87 = arith.constant 0 : index
    %220 = vector.load %arg6[%c0_86, %c7, %c0_87] : memref<1x8x128xf32, #tpu.memory_space<vmem>>, vector<1x1x128xf32>
    %221 = vector.shape_cast %220 : vector<1x1x128xf32> to vector<1x128xf32>
    %cst_88 = arith.constant dense<0.000000e+00> : vector<16xf32>
    %222 = vector.multi_reduction <add>, %217, %cst_88 [1] : vector<16x128xf32> to vector<16xf32>
    %223 = vector.shape_cast %222 : vector<16xf32> to vector<16x1xf32>
    %cst_89 = arith.constant 1.280000e+02 : f32
    %224 = vector.broadcast %cst_89 : f32 to vector<16x1xf32>
    %225 = arith.divf %223, %224 : vector<16x1xf32>
    %226 = vector.broadcast %225 : vector<16x1xf32> to vector<16x128xf32>
    %227 = arith.subf %217, %226 : vector<16x128xf32>
    %228 = arith.mulf %227, %227 : vector<16x128xf32>
    %cst_90 = arith.constant dense<0.000000e+00> : vector<16xf32>
    %229 = vector.multi_reduction <add>, %228, %cst_90 [1] : vector<16x128xf32> to vector<16xf32>
    %230 = vector.shape_cast %229 : vector<16xf32> to vector<16x1xf32>
    %cst_91 = arith.constant 1.280000e+02 : f32
    %231 = vector.broadcast %cst_91 : f32 to vector<16x1xf32>
    %232 = arith.divf %230, %231 : vector<16x1xf32>
    %233 = vector.broadcast %225 : vector<16x1xf32> to vector<16x128xf32>
    %234 = arith.subf %217, %233 : vector<16x128xf32>
    %cst_92 = arith.constant 9.99999974E-6 : f32
    %235 = vector.broadcast %cst_92 : f32 to vector<16x1xf32>
    %236 = arith.addf %232, %235 : vector<16x1xf32>
    %237 = math.rsqrt %236 : vector<16x1xf32>
    %238 = vector.broadcast %237 : vector<16x1xf32> to vector<16x128xf32>
    %239 = arith.mulf %234, %238 : vector<16x128xf32>
    %240 = vector.broadcast %219 : vector<1x128xf32> to vector<16x128xf32>
    %241 = arith.mulf %239, %240 : vector<16x128xf32>
    %242 = vector.broadcast %221 : vector<1x128xf32> to vector<16x128xf32>
    %243 = arith.addf %241, %242 : vector<16x128xf32>
    %244 = arith.addf %173, %243 : vector<16x128xf32>
    %c0_93 = arith.constant 0 : index
    %c0_94 = arith.constant 0 : index
    %245 = vector.load %arg9[%c0_93, %c0_94] : memref<16x128xf32, #tpu.memory_space<vmem>>, vector<16x128xf32>
    tpu.vector_store %arg9[%c0_93, %c0_94], %244 {strides = array<i32>} : memref<16x128xf32, #tpu.memory_space<vmem>>, vector<16x128xf32>,
    %c1_i32 = arith.constant 1 : i32
    %246 = arith.cmpi eq, %arg1, %c1_i32 : i32
    %247 = arith.extui %246 : i1 to i32
    %c0_i32_95 = arith.constant 0 : i32
    %248 = arith.cmpi ne, %247, %c0_i32_95 : i32
    scf.if %248 {
      %c0_96 = arith.constant 0 : index
      %c0_97 = arith.constant 0 : index
      %249 = vector.load %arg9[%c0_96, %c0_97] : memref<16x128xf32, #tpu.memory_space<vmem>>, vector<16x128xf32>
      %c0_98 = arith.constant 0 : index
      %c0_99 = arith.constant 0 : index
      %250 = vector.load %arg8[%c0_98, %c0_99] : memref<16x128xf32, #tpu.memory_space<vmem>>, vector<16x128xf32>
      tpu.vector_store %arg8[%c0_98, %c0_99], %249 {strides = array<i32>} : memref<16x128xf32, #tpu.memory_space<vmem>>, vector<16x128xf32>,
    } else {
    }
    return
  }
  func.func @transform_0(%arg0: i32, %arg1: i32) -> (i32, i32) {
    %c0_i32 = arith.constant 0 : i32
    %c0_i32_0 = arith.constant 0 : i32
    return %arg0, %c0_i32 : i32, i32
  }
  func.func @transform_1(%arg0: i32, %arg1: i32) -> (i32, i32) {
    %c0_i32 = arith.constant 0 : i32
    %c0_i32_0 = arith.constant 0 : i32
    %c0_i32_1 = arith.constant 0 : i32
    return %c0_i32, %c0_i32_0 : i32, i32
  }
  func.func @transform_2(%arg0: i32, %arg1: i32) -> (i32, i32, i32) {
    %c0_i32 = arith.constant 0 : i32
    %c0_i32_0 = arith.constant 0 : i32
    %c0_i32_1 = arith.constant 0 : i32
    return %arg1, %c0_i32, %c0_i32_0 : i32, i32, i32
  }
  func.func @transform_3(%arg0: i32, %arg1: i32) -> (i32, i32, i32) {
    %c0_i32 = arith.constant 0 : i32
    %c0_i32_0 = arith.constant 0 : i32
    %c0_i32_1 = arith.constant 0 : i32
    return %arg1, %c0_i32, %c0_i32_0 : i32, i32, i32
  }
  func.func @transform_4(%arg0: i32, %arg1: i32) -> (i32, i32, i32) {
    %c0_i32 = arith.constant 0 : i32
    %c0_i32_0 = arith.constant 0 : i32
    %c0_i32_1 = arith.constant 0 : i32
    return %arg1, %c0_i32, %c0_i32_0 : i32, i32, i32
  }
  func.func @transform_5(%arg0: i32, %arg1: i32) -> (i32, i32, i32) {
    %c0_i32 = arith.constant 0 : i32
    %c0_i32_0 = arith.constant 0 : i32
    %c0_i32_1 = arith.constant 0 : i32
    return %arg1, %c0_i32, %c0_i32_0 : i32, i32, i32
  }
  func.func @transform_6(%arg0: i32, %arg1: i32) -> (i32, i32) {
    %c0_i32 = arith.constant 0 : i32
    %c0_i32_0 = arith.constant 0 : i32
    return %arg0, %c0_i32 : i32, i32
  }
}

</mosaic_0001>

<llo_original>
// kernel: tpu_custom_call.1
$region0: #{tpu_custom_call.1}
  #allocation0 [shape = 'u32[]', space=smem, size = 0x4, offset = 0x4, fixed_abs, tag = 'smem constant byte address 0x4 - core index']
  #allocation1 [shape = 'u32[72,128]{1,0:T(1,128)}', space=vmem, size = 0x9000, scoped, tag = 'internal scratch']
  #allocation2 [shape = 'f32[16,128]{1,0:T(8,128)}', space=vmem, size = 0x2000, scoped, tag = 'scratch operand']
  %s0 = inlined_call_operand.hbm [shape: f32[16,128], index: 0, kind: input, shape index: {}]
  %s1 = inlined_call_operand.hbm [shape: f32[16,16], index: 1, kind: input, shape index: {}]
  %s2 = inlined_call_operand.hbm [shape: bf16[2,128,1024], index: 2, kind: input, shape index: {}]
  %s3 = inlined_call_operand.hbm [shape: bf16[2,512,128], index: 3, kind: input, shape index: {}]
  %s4 = inlined_call_operand.hbm [shape: f32[2,8,128], index: 4, kind: input, shape index: {}]
  %s5 = inlined_call_operand.hbm [shape: f32[2,1,1152], index: 5, kind: input, shape index: {}]
  %s6 = inlined_call_operand.hbm [shape: f32[16,128], index: 6, kind: output, shape index: {}]
  %s7 = sld [smem:[#allocation0]]
  $region89: #{tpu_custom_call.1} parent=0
    _
  %s9 = ssub.s32 1, %s7
  %s10 = scalar_select 0, %s9, %s7
  $region1: #{tpu_custom_call.1} parent=0
    #allocation3 [shape = 'u8[8192]{0}', space=vmem, size = 0x2000, scoped, tag = 'input window, operand 0, single buffered']
    #allocation4 [shape = 's32[2]{0}', space=sflag, size = 0x8, scoped, tag = 'scoped memory for tpu_custom_call.1']
    #allocation5 [shape = 's32[2]{0}', space=sflag, size = 0x8, scoped, tag = 'scoped memory for tpu_custom_call.1']
    #allocation6 [shape = 'u8[8192]{0}', space=vmem, size = 0x2000, scoped, tag = 'input window, operand 1, single buffered']
    #allocation7 [shape = 's32[1]{0}', space=sflag, size = 0x4, scoped, tag = 'scoped memory for tpu_custom_call.1']
    #allocation8 [shape = 'u8[524288]{0}', space=vmem, size = 0x80000, scoped, tag = 'input window, operand 2']
    #allocation9 [shape = 'u8[262144]{0}', space=vmem, size = 0x40000, scoped, tag = 'input window, operand 3']
    #allocation10 [shape = 'u8[8192]{0}', space=vmem, size = 0x2000, scoped, tag = 'input window, operand 4']
    #allocation11 [shape = 'u8[9216]{0}', space=vmem, size = 0x2400, scoped, tag = 'input window, operand 5']
    #allocation12 [shape = 'u8[8192]{0}', space=vmem, size = 0x2000, scoped, tag = 'output window, operand 0, single buffered']
    %11 = vsyncpa [#allocation4], 0
    %12 = vsyncpa [#allocation7], 0
    %13 = vsyncpa [#allocation5], 0
    loop: start=0, step=1, limit=4
    $region2: #{tpu_custom_call.1} parent=1 // loop_pre_header
      _
    $region3: #{tpu_custom_call.1} parent=1 // loop_header
      %s15 = sphi 0, %s19
      %p16 = scmp.ge.s32.totalorder %s15, 4
      %s22 = sphi 0, %s34
      %s23 = sphi 0, %s30
      %s24 = sphi 0, %s22
      %s25 = sphi 0, %s23
      %s26 = sphi 0, %s24
      %s27 = sphi 0, %s25
      %s37 = sphi 0, %s39
      %s40 = sphi 0, %s37
      %s41 = sphi 0, %s40
      %s57 = sphi 0, %s41
      %s61 = sphi 0, %s61
      %s63 = sphi 0, %s61
      %s64 = sphi 0, %s63
      %s78 = sphi 0, %s64
      %s84 = sphi 0, %s86
      %s87 = sphi 0, %s84
      %s88 = sphi 0, %s87
      %s104 = sphi 0, %s88
      %s110 = sphi 0, %s112
      %s113 = sphi 0, %s110
      %s114 = sphi 0, %s113
      %s130 = sphi 0, %s114
      %s136 = sphi 0, %s138
      %s139 = sphi 0, %s136
      %s140 = sphi 0, %s139
      %s156 = sphi 0, %s140
      %s162 = sphi 0, %s164
      %s165 = sphi 0, %s162
      %s166 = sphi 0, %s165
      %s182 = sphi 0, %s166
      %s188 = sphi 0, %s190
      %s191 = sphi 0, %s188
      %s192 = sphi 0, %s191
      %s208 = sphi 0, %s192
    $region4: #{tpu_custom_call.1} parent=1 // loop_header_branch
      %18 = sbr.rel (%p16) target = $region8
    $region5: #{tpu_custom_call.1} parent=1 // loop_body
      %s20 = ssub.s32 %s15, 1
      %s21 = ssub.s32 %s15, 2
      %s28 = sadd.s32 1, %s23
      %p29 = scmp.ge.s32.totalorder %s28, 2
      %s30 = scalar_select %p29, 0, %s28
      %s31 = sadd.s32 1, %s22
      %s32 = scalar_select %p29, %s31, %s22
      %p33 = scmp.ge.s32.totalorder %s32, 1
      %s34 = scalar_select %p33, 0, %s32
      %s35 = ssub.s32 %s22, %s34
      %p36 = scmp.eq.s32.totalorder %s35, 0
      %s38 = sadd.s32 %s37, 1
      %s39 = scalar_select %p36, %s37, %s38
      %p42 = pneg %p36
      %p43 = scmp.eq.s32.totalorder %s15, 1
      %p44 = por %p42, %p43
      %p45 = scmp.ne.s32.totalorder %s37, %s40
      %p46 = scmp.eq.s32.totalorder %s15, 0
      %p47 = por %p45, %p46
      %p48 = scmp.ne.s32.totalorder %s37, %s40
      %p49 = scmp.eq.s32.totalorder %s20, 1
      %p50 = por %p48, %p49
      %p51 = scmp.ne.s32.totalorder %s40, %s41
      %p52 = scmp.eq.s32.totalorder %s20, 0
      %p53 = por %p51, %p52
      %p54 = scmp.ne.s32.totalorder %s40, %s41
      %p55 = scmp.eq.s32.totalorder %s21, 1
      %p56 = por %p54, %p55
      %p58 = scmp.ne.s32.totalorder %s41, %s57
      %p59 = scmp.eq.s32.totalorder %s21, 0
      %p60 = por %p58, %p59
      %s62 = sadd.s32 %s61, 1
      %p65 = scmp.eq.s32.totalorder %s15, 1
      %p66 = scmp.ne.s32.totalorder %s61, %s63
      %p67 = scmp.eq.s32.totalorder %s15, 0
      %p68 = por %p66, %p67
      %p69 = scmp.ne.s32.totalorder %s61, %s63
      %p70 = scmp.eq.s32.totalorder %s20, 1
      %p71 = por %p69, %p70
      %p72 = scmp.ne.s32.totalorder %s63, %s64
      %p73 = scmp.eq.s32.totalorder %s20, 0
      %p74 = por %p72, %p73
      %p75 = scmp.ne.s32.totalorder %s63, %s64
      %p76 = scmp.eq.s32.totalorder %s21, 1
      %p77 = por %p75, %p76
      %p79 = scmp.ne.s32.totalorder %s64, %s78
      %p80 = scmp.eq.s32.totalorder %s21, 0
      %p81 = por %p79, %p80
      %s82 = ssub.s32 %s23, %s30
      %p83 = scmp.eq.s32.totalorder %s82, 0
      %s85 = sadd.s32 %s84, 1
      %s86 = scalar_select %p83, %s84, %s85
      %p89 = pneg %p83
      %p90 = scmp.eq.s32.totalorder %s15, 1
      %p91 = por %p89, %p90
      %p92 = scmp.ne.s32.totalorder %s84, %s87
      %p93 = scmp.eq.s32.totalorder %s15, 0
      %p94 = por %p92, %p93
      %p95 = scmp.ne.s32.totalorder %s84, %s87
      %p96 = scmp.eq.s32.totalorder %s20, 1
      %p97 = por %p95, %p96
      %p98 = scmp.ne.s32.totalorder %s87, %s88
      %p99 = scmp.eq.s32.totalorder %s20, 0
      %p100 = por %p98, %p99
      %p101 = scmp.ne.s32.totalorder %s87, %s88
      %p102 = scmp.eq.s32.totalorder %s21, 1
      %p103 = por %p101, %p102
      %p105 = scmp.ne.s32.totalorder %s88, %s104
      %p106 = scmp.eq.s32.totalorder %s21, 0
      %p107 = por %p105, %p106
      %s108 = ssub.s32 %s23, %s30
      %p109 = scmp.eq.s32.totalorder %s108, 0
      %s111 = sadd.s32 %s110, 1
      %s112 = scalar_select %p109, %s110, %s111
      %p115 = pneg %p109
      %p116 = scmp.eq.s32.totalorder %s15, 1
      %p117 = por %p115, %p116
      %p118 = scmp.ne.s32.totalorder %s110, %s113
      %p119 = scmp.eq.s32.totalorder %s15, 0
      %p120 = por %p118, %p119
      %p121 = scmp.ne.s32.totalorder %s110, %s113
      %p122 = scmp.eq.s32.totalorder %s20, 1
      %p123 = por %p121, %p122
      %p124 = scmp.ne.s32.totalorder %s113, %s114
      %p125 = scmp.eq.s32.totalorder %s20, 0
      %p126 = por %p124, %p125
      %p127 = scmp.ne.s32.totalorder %s113, %s114
      %p128 = scmp.eq.s32.totalorder %s21, 1
      %p129 = por %p127, %p128
      %p131 = scmp.ne.s32.totalorder %s114, %s130
      %p132 = scmp.eq.s32.totalorder %s21, 0
      %p133 = por %p131, %p132
      %s134 = ssub.s32 %s23, %s30
      %p135 = scmp.eq.s32.totalorder %s134, 0
      %s137 = sadd.s32 %s136, 1
      %s138 = scalar_select %p135, %s136, %s137
      %p141 = pneg %p135
      %p142 = scmp.eq.s32.totalorder %s15, 1
      %p143 = por %p141, %p142
      %p144 = scmp.ne.s32.totalorder %s136, %s139
      %p145 = scmp.eq.s32.totalorder %s15, 0
      %p146 = por %p144, %p145
      %p147 = scmp.ne.s32.totalorder %s136, %s139
      %p148 = scmp.eq.s32.totalorder %s20, 1
      %p149 = por %p147, %p148
      %p150 = scmp.ne.s32.totalorder %s139, %s140
      %p151 = scmp.eq.s32.totalorder %s20, 0
      %p152 = por %p150, %p151
      %p153 = scmp.ne.s32.totalorder %s139, %s140
      %p154 = scmp.eq.s32.totalorder %s21, 1
      %p155 = por %p153, %p154
      %p157 = scmp.ne.s32.totalorder %s140, %s156
      %p158 = scmp.eq.s32.totalorder %s21, 0
      %p159 = por %p157, %p158
      %s160 = ssub.s32 %s23, %s30
      %p161 = scmp.eq.s32.totalorder %s160, 0
      %s163 = sadd.s32 %s162, 1
      %s164 = scalar_select %p161, %s162, %s163
      %p167 = pneg %p161
      %p168 = scmp.eq.s32.totalorder %s15, 1
      %p169 = por %p167, %p168
      %p170 = scmp.ne.s32.totalorder %s162, %s165
      %p171 = scmp.eq.s32.totalorder %s15, 0
      %p172 = por %p170, %p171
      %p173 = scmp.ne.s32.totalorder %s162, %s165
      %p174 = scmp.eq.s32.totalorder %s20, 1
      %p175 = por %p173, %p174
      %p176 = scmp.ne.s32.totalorder %s165, %s166
      %p177 = scmp.eq.s32.totalorder %s20, 0
      %p178 = por %p176, %p177
      %p179 = scmp.ne.s32.totalorder %s165, %s166
      %p180 = scmp.eq.s32.totalorder %s21, 1
      %p181 = por %p179, %p180
      %p183 = scmp.ne.s32.totalorder %s166, %s182
      %p184 = scmp.eq.s32.totalorder %s21, 0
      %p185 = por %p183, %p184
      %s186 = ssub.s32 %s22, %s34
      %p187 = scmp.eq.s32.totalorder %s186, 0
      %s189 = sadd.s32 %s188, 1
      %s190 = scalar_select %p187, %s188, %s189
      %p193 = pneg %p187
      %p194 = scmp.eq.s32.totalorder %s15, 1
      %p195 = por %p193, %p194
      %p196 = scmp.ne.s32.totalorder %s188, %s191
      %p197 = scmp.eq.s32.totalorder %s15, 0
      %p198 = por %p196, %p197
      %p199 = scmp.ne.s32.totalorder %s188, %s191
      %p200 = scmp.eq.s32.totalorder %s20, 1
      %p201 = por %p199, %p200
      %p202 = scmp.ne.s32.totalorder %s191, %s192
      %p203 = scmp.eq.s32.totalorder %s20, 0
      %p204 = por %p202, %p203
      %p205 = scmp.ne.s32.totalorder %s191, %s192
      %p206 = scmp.eq.s32.totalorder %s21, 1
      %p207 = por %p205, %p206
      %p209 = scmp.ne.s32.totalorder %s192, %s208
      %p210 = scmp.eq.s32.totalorder %s21, 0
      %p211 = por %p209, %p210
      %p212 = scmp.le.s32.totalorder 1, %s15
      %p213 = scmp.lt.s32.totalorder %s15, 3
      %p214 = pnand %p212, %p213
      %p215 = pneg %p214
      // Predicated region
      $region9: #{tpu_custom_call.1} parent=5 // pred_check
        _
      $region10: #{tpu_custom_call.1} parent=5 // pred_check_branch
        %217 = sbr.rel (%p214) target = $region12
      $region11: #{tpu_custom_call.1} parent=5 // pred_region
        %s218 = ssub.s32 %s15, 1
        // Predicated region
        $region13: #{tpu_custom_call.1} parent=11 // pred_check
          %p219 = pneg %p53
        $region14: #{tpu_custom_call.1} parent=11 // pred_check_branch
          %221 = sbr.rel (%p219) target = $region16
        $region15: #{tpu_custom_call.1} parent=11 // pred_region
          %s222 = smul.u32 2, %s24
          %224 = vsyncadd [#allocation4], 0
          %s225 = smul.addr %s222, 8
          %s226 = scalar_lea.hbm %s0, %s225
          %s227 = sshll.u32 %s226, 4
          %s228 = int_to_ptr.hbm [resolvable:$true] %s227
          %s229 = sshll.u32 [#allocation3], 4
          %s230 = int_to_ptr.vmem [resolvable:$true] %s229
          %235 = dma.hbm_to_vmem [thread:$0]  %s228, 256, %s230, [#allocation4], 128, 128, 8
        $region16: #{tpu_custom_call.1} parent=11 // pred_fallthru
          _
        // Predicated region
        $region17: #{tpu_custom_call.1} parent=11 // pred_check
          %p236 = pneg %p74
        $region18: #{tpu_custom_call.1} parent=11 // pred_check_branch
          %238 = sbr.rel (%p236) target = $region20
        $region19: #{tpu_custom_call.1} parent=11 // pred_region
          %240 = vsyncadd [#allocation7], 0
          %s241 = sshll.u32 %s1, 4
          %s242 = int_to_ptr.hbm [resolvable:$true] %s241
          %s243 = sshll.u32 [#allocation6], 4
          %s244 = int_to_ptr.vmem [resolvable:$true] %s243
          %249 = dma.hbm_to_vmem [thread:$0]  %s242, 256, %s244, [#allocation7], 128, 128, 8
        $region20: #{tpu_custom_call.1} parent=11 // pred_fallthru
          _
      $region12: #{tpu_custom_call.1} parent=5 // pred_fallthru
        _
      %p250 = scmp.lt.s32.totalorder %s15, 2
      // Predicated region
      $region21: #{tpu_custom_call.1} parent=5 // pred_check
        %p251 = pneg %p250
      $region22: #{tpu_custom_call.1} parent=5 // pred_check_branch
        %253 = sbr.rel (%p251) target = $region24
      $region23: #{tpu_custom_call.1} parent=5 // pred_region
        // Predicated region
        $region25: #{tpu_custom_call.1} parent=23 // pred_check
          %p254 = pneg %p94
        $region26: #{tpu_custom_call.1} parent=23 // pred_check_branch
          %256 = sbr.rel (%p254) target = $region28
        $region27: #{tpu_custom_call.1} parent=23 // pred_region
          %s257 = sand.u32 %s15, 1
          %s258 = scalar_lea.sflag [#allocation4], %s257
          %s259 = sand.u32 %s84, 1
          %s260 = smul.addr %s259, 512
          %s261 = scalar_lea.vmem [#allocation8], %s260
          %263 = vsyncadd %s258, 0
          %s264 = smul.addr %s23, 128
          %s265 = smul.addr %s264, 4
          %s266 = scalar_lea.hbm %s2, %s265
          %s267 = sshll.u32 %s266, 4
          %s268 = int_to_ptr.hbm [resolvable:$true] %s267
          %s269 = sshll.u32 %s261, 4
          %s270 = int_to_ptr.vmem [resolvable:$true] %s269
          %275 = dma.hbm_to_vmem [thread:$0]  %s268, 8192, %s270, %s258, 512, 512, 32
        $region28: #{tpu_custom_call.1} parent=23 // pred_fallthru
          _
        // Predicated region
        $region29: #{tpu_custom_call.1} parent=23 // pred_check
          %p276 = pneg %p120
        $region30: #{tpu_custom_call.1} parent=23 // pred_check_branch
          %278 = sbr.rel (%p276) target = $region32
        $region31: #{tpu_custom_call.1} parent=23 // pred_region
          %s279 = sand.u32 %s15, 1
          %s280 = scalar_lea.sflag [#allocation4], %s279
          %s281 = sand.u32 %s110, 1
          %s282 = smul.addr %s281, 256
          %s283 = scalar_lea.vmem [#allocation9], %s282
          %285 = vsyncadd %s280, 0
          %s286 = smul.addr %s23, 64
          %s287 = smul.addr %s286, 4
          %s288 = scalar_lea.hbm %s3, %s287
          %s289 = sshll.u32 %s288, 4
          %s290 = int_to_ptr.hbm [resolvable:$true] %s289
          %s291 = sshll.u32 %s283, 4
          %s292 = int_to_ptr.vmem [resolvable:$true] %s291
          %297 = dma.hbm_to_vmem [thread:$0]  %s290, 4096, %s292, %s280, 64, 64, 4
        $region32: #{tpu_custom_call.1} parent=23 // pred_fallthru
          _
        // Predicated region
        $region33: #{tpu_custom_call.1} parent=23 // pred_check
          %p298 = pneg %p146
        $region34: #{tpu_custom_call.1} parent=23 // pred_check_branch
          %300 = sbr.rel (%p298) target = $region36
        $region35: #{tpu_custom_call.1} parent=23 // pred_region
          %s301 = sand.u32 %s15, 1
          %s302 = scalar_lea.sflag [#allocation4], %s301
          %s303 = sand.u32 %s136, 1
          %s304 = smul.addr %s303, 8
          %s305 = scalar_lea.vmem [#allocation10], %s304
          %307 = vsyncadd %s302, 0
          %s308 = smul.addr %s23, 8
          %s309 = scalar_lea.hbm %s4, %s308
          %s311 = sshll.u32 %s309, 4
          %s312 = int_to_ptr.hbm [resolvable:$true] %s311
          %s313 = sshll.u32 %s305, 4
          %s314 = int_to_ptr.vmem [resolvable:$true] %s313
          %316 = dma.hbm_to_vmem [thread:$0]  %s312, 128, %s314, %s302
        $region36: #{tpu_custom_call.1} parent=23 // pred_fallthru
          _
        // Predicated region
        $region37: #{tpu_custom_call.1} parent=23 // pred_check
          %p317 = pneg %p172
        $region38: #{tpu_custom_call.1} parent=23 // pred_check_branch
          %319 = sbr.rel (%p317) target = $region40
        $region39: #{tpu_custom_call.1} parent=23 // pred_region
          %s320 = sand.u32 %s15, 1
          %s321 = scalar_lea.sflag [#allocation4], %s320
          %s322 = sand.u32 %s162, 1
          %s323 = smul.addr %s322, 9
          %s324 = scalar_lea.vmem [#allocation11], %s323
          %326 = vsyncadd %s321, 0
          %s327 = smul.addr %s23, 9
          %s328 = scalar_lea.hbm %s5, %s327
          %s330 = sshll.u32 %s328, 4
          %s331 = int_to_ptr.hbm [resolvable:$true] %s330
          %s332 = sshll.u32 %s324, 4
          %s333 = int_to_ptr.vmem [resolvable:$true] %s332
          %335 = dma.hbm_to_vmem [thread:$0]  %s331, 144, %s333, %s321
        $region40: #{tpu_custom_call.1} parent=23 // pred_fallthru
          _
      $region24: #{tpu_custom_call.1} parent=5 // pred_fallthru
        _
      %p336 = scmp.le.s32.totalorder 1, %s15
      %p337 = scmp.lt.s32.totalorder %s15, 3
      %p338 = pnand %p336, %p337
      %p339 = pneg %p338
      // Predicated region
      $region41: #{tpu_custom_call.1} parent=5 // pred_check
        _
      $region42: #{tpu_custom_call.1} parent=5 // pred_check_branch
        %341 = sbr.rel (%p338) target = $region44
      $region43: #{tpu_custom_call.1} parent=5 // pred_region
        %s342 = ssub.s32 %s15, 1
        // Predicated region
        $region45: #{tpu_custom_call.1} parent=43 // pred_check
          %p343 = pneg %p53
        $region46: #{tpu_custom_call.1} parent=43 // pred_check_branch
          %345 = sbr.rel (%p343) target = $region48
        $region47: #{tpu_custom_call.1} parent=43 // pred_region
          %347 = dma.done [#allocation4], 256
        $region48: #{tpu_custom_call.1} parent=43 // pred_fallthru
          _
        // Predicated region
        $region49: #{tpu_custom_call.1} parent=43 // pred_check
          %p348 = pneg %p74
        $region50: #{tpu_custom_call.1} parent=43 // pred_check_branch
          %350 = sbr.rel (%p348) target = $region52
        $region51: #{tpu_custom_call.1} parent=43 // pred_region
          %352 = dma.done [#allocation7], 256
        $region52: #{tpu_custom_call.1} parent=43 // pred_fallthru
          _
        %s353 = sand.u32 %s20, 1
        %s354 = scalar_lea.sflag [#allocation4], %s353
        %s355 = sand.u32 %s87, 1
        %s356 = smul.addr %s355, 512
        %s357 = scalar_lea.vmem [#allocation8], %s356
        // Predicated region
        $region53: #{tpu_custom_call.1} parent=43 // pred_check
          %p358 = pneg %p100
        $region54: #{tpu_custom_call.1} parent=43 // pred_check_branch
          %360 = sbr.rel (%p358) target = $region56
        $region55: #{tpu_custom_call.1} parent=43 // pred_region
          %362 = dma.done %s354, 8192
        $region56: #{tpu_custom_call.1} parent=43 // pred_fallthru
          _
        %s363 = sand.u32 %s20, 1
        %s364 = scalar_lea.sflag [#allocation4], %s363
        %s365 = sand.u32 %s113, 1
        %s366 = smul.addr %s365, 256
        %s367 = scalar_lea.vmem [#allocation9], %s366
        // Predicated region
        $region57: #{tpu_custom_call.1} parent=43 // pred_check
          %p368 = pneg %p126
        $region58: #{tpu_custom_call.1} parent=43 // pred_check_branch
          %370 = sbr.rel (%p368) target = $region60
        $region59: #{tpu_custom_call.1} parent=43 // pred_region
          %372 = dma.done %s364, 4096
        $region60: #{tpu_custom_call.1} parent=43 // pred_fallthru
          _
        %s373 = sand.u32 %s20, 1
        %s374 = scalar_lea.sflag [#allocation4], %s373
        %s375 = sand.u32 %s139, 1
        %s376 = smul.addr %s375, 8
        %s377 = scalar_lea.vmem [#allocation10], %s376
        // Predicated region
        $region61: #{tpu_custom_call.1} parent=43 // pred_check
          %p378 = pneg %p152
        $region62: #{tpu_custom_call.1} parent=43 // pred_check_branch
          %380 = sbr.rel (%p378) target = $region64
        $region63: #{tpu_custom_call.1} parent=43 // pred_region
          %382 = dma.done %s374, 128
        $region64: #{tpu_custom_call.1} parent=43 // pred_fallthru
          _
        %s383 = sand.u32 %s20, 1
        %s384 = scalar_lea.sflag [#allocation4], %s383
        %s385 = sand.u32 %s165, 1
        %s386 = smul.addr %s385, 9
        %s387 = scalar_lea.vmem [#allocation11], %s386
        // Predicated region
        $region65: #{tpu_custom_call.1} parent=43 // pred_check
          %p388 = pneg %p178
        $region66: #{tpu_custom_call.1} parent=43 // pred_check_branch
          %390 = sbr.rel (%p388) target = $region68
        $region67: #{tpu_custom_call.1} parent=43 // pred_region
          %392 = dma.done %s384, 144
        $region68: #{tpu_custom_call.1} parent=43 // pred_fallthru
          _
        %p393 = pneg %p53
        %p394 = pneg %p50
        %p395 = pneg %p74
        %p396 = pneg %p71
        %s397 = sand.u32 %s20, 1
        %s398 = scalar_lea.sflag [#allocation4], %s397
        %s399 = sand.u32 %s87, 1
        %s400 = smul.addr %s399, 512
        %s401 = scalar_lea.vmem [#allocation8], %s400
        %p402 = pneg %p100
        %p403 = pneg %p97
        %s404 = sand.u32 %s20, 1
        %s405 = scalar_lea.sflag [#allocation4], %s404
        %s406 = sand.u32 %s113, 1
        %s407 = smul.addr %s406, 256
        %s408 = scalar_lea.vmem [#allocation9], %s407
        %p409 = pneg %p126
        %p410 = pneg %p123
        %s411 = sand.u32 %s20, 1
        %s412 = scalar_lea.sflag [#allocation4], %s411
        %s413 = sand.u32 %s139, 1
        %s414 = smul.addr %s413, 8
        %s415 = scalar_lea.vmem [#allocation10], %s414
        %p416 = pneg %p152
        %p417 = pneg %p149
        %s418 = sand.u32 %s20, 1
        %s419 = scalar_lea.sflag [#allocation4], %s418
        %s420 = sand.u32 %s165, 1
        %s421 = smul.addr %s420, 9
        %s422 = scalar_lea.vmem [#allocation11], %s421
        %p423 = pneg %p178
        %p424 = pneg %p175
        %p425 = pneg %p204
        %p426 = pneg %p201
        %s427 = smul.u32 2, %s24
        %s428 = smul.u32 2, %s24
        %p430 = scmp.eq.s32.totalorder %s25, 0
        // Predicated region
        $region69: #{tpu_custom_call.1} parent=43 // pred_check
          %p431 = pneg %p430
        $region70: #{tpu_custom_call.1} parent=43 // pred_check_branch
          %433 = sbr.rel (%p431) target = $region72
        $region71: #{tpu_custom_call.1} parent=43 // pred_region
          %v434 = vld [vmem:[#allocation3] sm:$0xff]
          %v435 = vld [vmem:[#allocation3 + $0x8] sm:$0xff]
          %436 = vst [vmem:[#allocation2] sm:$0xff] %v434
          %437 = vst [vmem:[#allocation2 + $0x8] sm:$0xff] %v435
        $region72: #{tpu_custom_call.1} parent=43 // pred_fallthru
          _
        %v438 = vld [vmem:[#allocation2] sm:$0xff]
        %v439 = vld [vmem:[#allocation2 + $0x8] sm:$0xff]
        %v440 = vld [vmem:[%s377] sm:$0x1]
        %v441 = vld [vmem:[%s377 + $0x1] sm:$0x1]
        %442 = vadd.xlane.f32.xlu0 %v438
        %v443 = vpop.xlane.xlu0 %442
        %444 = vadd.xlane.f32.xlu0 %v439
        %v445 = vpop.xlane.xlu0 %444
        %v446 = vrcp.pop 128.0
        %v447 = vmul.f32 128.0, %v446
        %v448 = vsub.f32 1.0, %v447
        %v449 = vmul.f32 %v446, %v448
        %v450 = vadd.f32 %v446, %v449
        %vm451 = vweird.f32 %v446
        %v452 = vsel %vm451, %v446, %v450
        %v453 = vmul.f32 %v443, %v452
        %v454 = vmul.f32 %v445, %v452
        %v455 = vsub.f32 %v438, %v453
        %v456 = vsub.f32 %v439, %v454
        %v457 = vmul.f32 %v455, %v455
        %v458 = vmul.f32 %v456, %v456
        %459 = vadd.xlane.f32.xlu0 %v457
        %v460 = vpop.xlane.xlu0 %459
        %461 = vadd.xlane.f32.xlu0 %v458
        %v462 = vpop.xlane.xlu0 %461
        %v463 = vmul.f32 %v460, %v452
        %v464 = vmul.f32 %v462, %v452
        %v465 = vadd.f32 %v463, 1e-05
        %v466 = vadd.f32 %v464, 1e-05
        %v467 = vrsqrt.pop %v465
        %v468 = vmul.f32 %v467, %v465
        %v469 = vmul.f32 %v468, %v467
        %v470 = vmul.f32 0.5, %v469
        %v471 = vsub.f32 1.5, %v470
        %v472 = vmul.f32 %v467, %v471
        %vm473 = vweird.f32 %v465
        %vm474 = vweird.f32 %v467
        %vm475 = vmor %vm473, %vm474
        %v476 = vsel %vm475, %v467, %v472
        %v477 = vrsqrt.pop %v466
        %v478 = vmul.f32 %v477, %v466
        %v479 = vmul.f32 %v478, %v477
        %v480 = vmul.f32 0.5, %v479
        %v481 = vsub.f32 1.5, %v480
        %v482 = vmul.f32 %v477, %v481
        %vm483 = vweird.f32 %v466
        %vm484 = vweird.f32 %v477
        %vm485 = vmor %vm483, %vm484
        %v486 = vsel %vm485, %v477, %v482
        %v487 = vmul.f32 %v455, %v476
        %v488 = vmul.f32 %v456, %v486
        %v489 = vperm.slane %v440, 0
        %v490 = vmul.f32 %v487, %v489
        %v491 = vmul.f32 %v488, %v489
        %v492 = vperm.slane %v441, 0
        %v493 = vadd.f32 %v490, %v492
        %v494 = vadd.f32 %v491, %v492
        %v495 = vpack.c.bf16 %v494, %v493
        %v496 = vld [vmem:[%s357] sm:$0xff]
        %v497 = vld [vmem:[%s357 + $0x8] sm:$0xf]
        %v498 = vld [vmem:[%s357 + $0x20] sm:$0xff]
        %v499 = vld [vmem:[%s357 + $0x28] sm:$0xf]
        %v500 = vld [vmem:[%s357 + $0x40] sm:$0xff]
        %v501 = vld [vmem:[%s357 + $0x48] sm:$0xf]
        %v502 = vld [vmem:[%s357 + $0x60] sm:$0xff]
        %v503 = vld [vmem:[%s357 + $0x68] sm:$0xf]
        %v504 = vld [vmem:[%s357 + $0x80] sm:$0xff]
        %v505 = vld [vmem:[%s357 + $0x88] sm:$0xf]
        %v506 = vld [vmem:[%s357 + $0xa0] sm:$0xff]
        %v507 = vld [vmem:[%s357 + $0xa8] sm:$0xf]
        %v508 = vld [vmem:[%s357 + $0xc0] sm:$0xff]
        %v509 = vld [vmem:[%s357 + $0xc8] sm:$0xf]
        %v510 = vld [vmem:[%s357 + $0xe0] sm:$0xff]
        %v511 = vld [vmem:[%s357 + $0xe8] sm:$0xf]
        %v512 = vld [vmem:[%s357 + $0x100] sm:$0xff]
        %v513 = vld [vmem:[%s357 + $0x108] sm:$0xf]
        %v514 = vld [vmem:[%s357 + $0x120] sm:$0xff]
        %v515 = vld [vmem:[%s357 + $0x128] sm:$0xf]
        %v516 = vld [vmem:[%s357 + $0x140] sm:$0xff]
        %v517 = vld [vmem:[%s357 + $0x148] sm:$0xf]
        %v518 = vld [vmem:[%s357 + $0x160] sm:$0xff]
        %v519 = vld [vmem:[%s357 + $0x168] sm:$0xf]
        %v520 = vld [vmem:[%s357 + $0x180] sm:$0xff]
        %v521 = vld [vmem:[%s357 + $0x188] sm:$0xf]
        %v522 = vld [vmem:[%s357 + $0x1a0] sm:$0xff]
        %v523 = vld [vmem:[%s357 + $0x1a8] sm:$0xf]
        %v524 = vld [vmem:[%s357 + $0x1c0] sm:$0xff]
        %v525 = vld [vmem:[%s357 + $0x1c8] sm:$0xf]
        %v526 = vld [vmem:[%s357 + $0x1e0] sm:$0xff]
        %v527 = vld [vmem:[%s357 + $0x1e8] sm:$0xf]
        %v528 = vld [vmem:[%s387] sm:$0x7]
        %v530 = vperm.slane %v528, 0
        %v531 = vperm.slane %v528, 1
        %v532 = vperm.slane %v528, 2
        %v568 = vunpack.c.l.b16 %v496
        %v569 = vunpack.c.h.b16 %v496
        %v570 = vunpack.c.l.b16 %v497
        %v571 = vunpack.c.l.b16 %v498
        %v572 = vunpack.c.h.b16 %v498
        %v573 = vunpack.c.l.b16 %v499
        %v574 = vunpack.c.l.b16 %v500
        %v575 = vunpack.c.h.b16 %v500
        %v576 = vunpack.c.l.b16 %v501
        %v577 = vunpack.c.l.b16 %v502
        %v578 = vunpack.c.h.b16 %v502
        %v579 = vunpack.c.l.b16 %v503
        %v580 = vunpack.c.l.b16 %v504
        %v581 = vunpack.c.h.b16 %v504
        %v582 = vunpack.c.l.b16 %v505
        %v583 = vunpack.c.l.b16 %v506
        %v584 = vunpack.c.h.b16 %v506
        %v585 = vunpack.c.l.b16 %v507
        %v586 = vunpack.c.l.b16 %v508
        %v587 = vunpack.c.h.b16 %v508
        %v588 = vunpack.c.l.b16 %v509
        %v589 = vunpack.c.l.b16 %v510
        %v590 = vunpack.c.h.b16 %v510
        %v591 = vunpack.c.l.b16 %v511
        %v592 = vunpack.c.l.b16 %v512
        %v593 = vunpack.c.h.b16 %v512
        %v594 = vunpack.c.l.b16 %v513
        %v595 = vunpack.c.l.b16 %v514
        %v596 = vunpack.c.h.b16 %v514
        %v597 = vunpack.c.l.b16 %v515
        %v598 = vunpack.c.l.b16 %v516
        %v599 = vunpack.c.h.b16 %v516
        %v600 = vunpack.c.l.b16 %v517
        %v601 = vunpack.c.l.b16 %v518
        %v602 = vunpack.c.h.b16 %v518
        %v603 = vunpack.c.l.b16 %v519
        %v604 = vunpack.c.l.b16 %v520
        %v605 = vunpack.c.h.b16 %v520
        %v606 = vunpack.c.l.b16 %v521
        %v607 = vunpack.c.l.b16 %v522
        %v608 = vunpack.c.h.b16 %v522
        %v609 = vunpack.c.l.b16 %v523
        %v610 = vunpack.c.l.b16 %v524
        %v611 = vunpack.c.h.b16 %v524
        %v612 = vunpack.c.l.b16 %v525
        %v613 = vunpack.c.l.b16 %v526
        %v614 = vunpack.c.h.b16 %v526
        %v615 = vunpack.c.l.b16 %v527
        %v616 = vpack.c.b16 %v571, %v568
        %v617 = vpack.c.b16 %v572, %v569
        %v618 = vpack.c.b16 %v573, %v570
        %v619 = vpack.c.b16 %v577, %v574
        %v620 = vpack.c.b16 %v578, %v575
        %v621 = vpack.c.b16 %v579, %v576
        %v622 = vpack.c.b16 %v583, %v580
        %v623 = vpack.c.b16 %v584, %v581
        %v624 = vpack.c.b16 %v585, %v582
        %v625 = vpack.c.b16 %v589, %v586
        %v626 = vpack.c.b16 %v590, %v587
        %v627 = vpack.c.b16 %v591, %v588
        %v628 = vpack.c.b16 %v595, %v592
        %v629 = vpack.c.b16 %v596, %v593
        %v630 = vpack.c.b16 %v597, %v594
        %v631 = vpack.c.b16 %v601, %v598
        %v632 = vpack.c.b16 %v602, %v599
        %v633 = vpack.c.b16 %v603, %v600
        %v634 = vpack.c.b16 %v607, %v604
        %v635 = vpack.c.b16 %v608, %v605
        %v636 = vpack.c.b16 %v609, %v606
        %v637 = vpack.c.b16 %v613, %v610
        %v638 = vpack.c.b16 %v614, %v611
        %v639 = vpack.c.b16 %v615, %v612
        %664 = vmatpush.bf16.msra.mxu0 %v637
        %665 = vmatpush.bf16.msra.mxu0 %v634
        %666 = vmatpush.bf16.msra.mxu0 %v631
        %667 = vmatpush.bf16.msra.mxu0 %v628
        %668 = vmatpush.bf16.msra.mxu0 %v625
        %669 = vmatpush.bf16.msra.mxu0 %v622
        %670 = vmatpush.bf16.msra.mxu0 %v619
        %671 = vmatpush.bf16.msra.mxu0 %v616
        %672 = vmatmul.bf16.gmra.mxu0 %v495
        %v673 = vpop.f32.mrf.mxu0
        %v674 = vadd.f32 %v530, %v673
        %v675 = vpop.f32.mrf.mxu0
        %v676 = vadd.f32 %v530, %v675
        %677 = vdwg.mxu0
        %678 = vmatpush.bf16.msra.mxu0 %v638
        %679 = vmatpush.bf16.msra.mxu0 %v635
        %680 = vmatpush.bf16.msra.mxu0 %v632
        %681 = vmatpush.bf16.msra.mxu0 %v629
        %682 = vmatpush.bf16.msra.mxu0 %v626
        %683 = vmatpush.bf16.msra.mxu0 %v623
        %684 = vmatpush.bf16.msra.mxu0 %v620
        %685 = vmatpush.bf16.msra.mxu0 %v617
        %686 = vmatmul.bf16.gmra.mxu0 %v495
        %v687 = vpop.f32.mrf.mxu0
        %v688 = vadd.f32 %v531, %v687
        %v689 = vpop.f32.mrf.mxu0
        %v690 = vadd.f32 %v531, %v689
        %691 = vdwg.mxu0
        %692 = vmatpush.bf16.msra.mxu0 %v639
        %693 = vmatpush.bf16.msra.mxu0 %v636
        %694 = vmatpush.bf16.msra.mxu0 %v633
        %695 = vmatpush.bf16.msra.mxu0 %v630
        %696 = vmatpush.bf16.msra.mxu0 %v627
        %697 = vmatpush.bf16.msra.mxu0 %v624
        %698 = vmatpush.bf16.msra.mxu0 %v621
        %699 = vmatpush.bf16.msra.mxu0 %v618
        %700 = vmatmul.bf16.gmra.mxu0 %v495
        %v701 = vpop.f32.mrf.mxu0
        %v702 = vadd.f32 %v532, %v701
        %v703 = vpop.f32.mrf.mxu0
        %v704 = vadd.f32 %v532, %v703
        %705 = vdwg.mxu0
        %v706 = vmul.f32 %v674, 0.17677669
        %v707 = vmul.f32 %v676, 0.17677669
        %v708 = vld [vmem:[#allocation6] sm:$0xff]
        %v709 = vld [vmem:[#allocation6 + $0x8] sm:$0xff]
        %v710 = vpack.c.bf16 %v707, %v706
        %v711 = vpack.c.bf16 %v690, %v688
        %v712 = vpack.c.bf16 %v704, %v702
        %vm713 = vcmask 261120
        %v715 = vsel %vm713, %v710, 0
        %v718 = vsel %vm713, %v711, 0
        %720 = vmatpush.bf16.xpose.msra.mxu0 0
        %721 = vmatpush.bf16.xpose.msra.mxu0 0
        %722 = vmatpush.bf16.xpose.msra.mxu0 0
        %723 = vmatpush.bf16.xpose.msra.mxu0 0
        %724 = vmatpush.bf16.xpose.msra.mxu0 0
        %725 = vmatpush.bf16.xpose.msra.mxu0 0
        %726 = vmatpush.bf16.xpose.msra.mxu0 0
        %727 = vmatpush.bf16.xpose.msra.mxu0 %v718
        %728 = vmatmul.bf16.gmra.mxu0 %v715
        %v729 = vpop.f32.mrf.mxu0
        %v730 = vadd.f32 %v708, %v729
        %v731 = vpop.f32.mrf.mxu0
        %v732 = vadd.f32 %v709, %v731
        %733 = vdwg.mxu0
        %vm734 = vcmask 130048
        %v735 = vsel %vm734, %v730, -inf
        %736 = vmax.xlane.f32.xlu0 %v735
        %v737 = vpop.xlane.xlu0 %736
        %v738 = vsel %vm734, %v732, -inf
        %739 = vmax.xlane.f32.xlu0 %v738
        %v740 = vpop.xlane.xlu0 %739
        %v741 = vsub.f32 %v730, %v737
        %v742 = vsub.f32 %v732, %v740
        %v743 = vmul.f32 %v741, 1.442695
        %v744 = vpow.pop %v743
        %v745 = vmul.f32 %v742, 1.442695
        %v746 = vpow.pop %v745
        %v747 = vsel %vm734, %v744, 0.0
        %748 = vadd.xlane.f32.xlu0 %v747
        %v749 = vpop.xlane.xlu0 %748
        %v750 = vsel %vm734, %v746, 0.0
        %751 = vadd.xlane.f32.xlu0 %v750
        %v752 = vpop.xlane.xlu0 %751
        %v753 = vrcp.pop %v749
        %v754 = vrcp.pop %v752
        %v755 = vmul.f32 %v744, %v753
        %v756 = vmul.f32 %v746, %v754
        %v757 = vpack.c.bf16 %v756, %v755
        %v759 = vsel %vm734, %v757, 0
        %761 = vmatpush.bf16.msra.mxu0 0
        %762 = vmatpush.bf16.msra.mxu0 0
        %763 = vmatpush.bf16.msra.mxu0 0
        %764 = vmatpush.bf16.msra.mxu0 0
        %765 = vmatpush.bf16.msra.mxu0 0
        %766 = vmatpush.bf16.msra.mxu0 0
        %767 = vmatpush.bf16.msra.mxu0 0
        %768 = vmatpush.bf16.msra.mxu0 %v712
        %769 = vmatmul.bf16.gmra.mxu0 %v759
        %v770 = vpop.f32.mrf.mxu0
        %v771 = vadd.f32 0.0, %v770
        %v772 = vpop.f32.mrf.mxu0
        %v773 = vadd.f32 0.0, %v772
        %774 = vdwg.mxu0
        %v775 = vld [vmem:[%s357 + $0xc] sm:$0xf]
        %v776 = vld [vmem:[%s357 + $0x2c] sm:$0xf]
        %v777 = vld [vmem:[%s357 + $0x4c] sm:$0xf]
        %v778 = vld [vmem:[%s357 + $0x6c] sm:$0xf]
        %v779 = vpack.c.bf16 %v773, %v771
        %781 = vrot.lane.b32.xlu0 %v710, 96
        %v782 = vpop.permute.xlu0 %781
        %784 = vrot.lane.b32.xlu0 %v711, 96
        %v785 = vpop.permute.xlu0 %784
        %v787 = vsel %vm713, %v782, 0
        %v790 = vsel %vm713, %v785, 0
        %792 = vmatpush.bf16.xpose.msra.mxu0 0
        %793 = vmatpush.bf16.xpose.msra.mxu0 0
        %794 = vmatpush.bf16.xpose.msra.mxu0 0
        %795 = vmatpush.bf16.xpose.msra.mxu0 0
        %796 = vmatpush.bf16.xpose.msra.mxu0 0
        %797 = vmatpush.bf16.xpose.msra.mxu0 0
        %798 = vmatpush.bf16.xpose.msra.mxu0 0
        %799 = vmatpush.bf16.xpose.msra.mxu0 %v790
        %800 = vmatmul.bf16.gmra.mxu0 %v787
        %v801 = vpop.f32.mrf.mxu0
        %v802 = vadd.f32 %v708, %v801
        %v803 = vpop.f32.mrf.mxu0
        %v804 = vadd.f32 %v709, %v803
        %805 = vdwg.mxu0
        %v806 = vsel %vm734, %v802, -inf
        %807 = vmax.xlane.f32.xlu0 %v806
        %v808 = vpop.xlane.xlu0 %807
        %v809 = vsel %vm734, %v804, -inf
        %810 = vmax.xlane.f32.xlu0 %v809
        %v811 = vpop.xlane.xlu0 %810
        %v812 = vsub.f32 %v802, %v808
        %v813 = vsub.f32 %v804, %v811
        %v814 = vmul.f32 %v812, 1.442695
        %v815 = vpow.pop %v814
        %v816 = vmul.f32 %v813, 1.442695
        %v817 = vpow.pop %v816
        %v818 = vsel %vm734, %v815, 0.0
        %819 = vadd.xlane.f32.xlu0 %v818
        %v820 = vpop.xlane.xlu0 %819
        %v821 = vsel %vm734, %v817, 0.0
        %822 = vadd.xlane.f32.xlu0 %v821
        %v823 = vpop.xlane.xlu0 %822
        %v824 = vrcp.pop %v820
        %v825 = vrcp.pop %v823
        %v826 = vmul.f32 %v815, %v824
        %v827 = vmul.f32 %v817, %v825
        %v828 = vpack.c.bf16 %v827, %v826
        %830 = vrot.lane.b32.xlu0 %v712, 96
        %v831 = vpop.permute.xlu0 %830
        %v834 = vsel %vm734, %v828, 0
        %836 = vmatpush.bf16.msra.mxu0 0
        %837 = vmatpush.bf16.msra.mxu0 0
        %838 = vmatpush.bf16.msra.mxu0 0
        %839 = vmatpush.bf16.msra.mxu0 0
        %840 = vmatpush.bf16.msra.mxu0 0
        %841 = vmatpush.bf16.msra.mxu0 0
        %842 = vmatpush.bf16.msra.mxu0 0
        %843 = vmatpush.bf16.msra.mxu0 %v831
        %844 = vmatmul.bf16.gmra.mxu0 %v834
        %v845 = vpop.f32.mrf.mxu0
        %v846 = vadd.f32 0.0, %v845
        %v847 = vpop.f32.mrf.mxu0
        %v848 = vadd.f32 0.0, %v847
        %849 = vdwg.mxu0
        %v850 = vld [vmem:[%s357 + $0x8c] sm:$0xf]
        %v851 = vld [vmem:[%s357 + $0xac] sm:$0xf]
        %v852 = vld [vmem:[%s357 + $0xcc] sm:$0xf]
        %v853 = vld [vmem:[%s357 + $0xec] sm:$0xf]
        %v854 = vpack.c.bf16 %v848, %v846
        %v859 = vunpack.c.l.b16 %v850
        %v860 = vunpack.c.l.b16 %v851
        %v861 = vunpack.c.l.b16 %v852
        %v862 = vunpack.c.l.b16 %v853
        %v863 = vpack.c.b16 %v860, %v859
        %v864 = vpack.c.b16 %v862, %v861
        %v868 = vsel %vm713, %v854, 0
        %870 = vmatpush.bf16.msra.mxu0 0
        %871 = vmatpush.bf16.msra.mxu0 0
        %872 = vmatpush.bf16.msra.mxu0 0
        %873 = vmatpush.bf16.msra.mxu0 0
        %874 = vmatpush.bf16.msra.mxu0 0
        %875 = vmatpush.bf16.msra.mxu0 0
        %876 = vmatpush.bf16.msra.mxu0 %v864
        %877 = vmatpush.bf16.msra.mxu0 %v863
        %878 = vmatmul.bf16.gmra.mxu0 %v868
        %v879 = vpop.f32.mrf.mxu0
        %v880 = vadd.f32 0.0, %v879
        %v881 = vpop.f32.mrf.mxu0
        %v882 = vadd.f32 0.0, %v881
        %883 = vdwg.mxu0
        %v888 = vunpack.c.l.b16 %v775
        %v889 = vunpack.c.l.b16 %v776
        %v890 = vunpack.c.l.b16 %v777
        %v891 = vunpack.c.l.b16 %v778
        %v892 = vpack.c.b16 %v889, %v888
        %v893 = vpack.c.b16 %v891, %v890
        %v897 = vsel %vm713, %v779, 0
        %899 = vmatpush.bf16.msra.mxu0 0
        %900 = vmatpush.bf16.msra.mxu0 0
        %901 = vmatpush.bf16.msra.mxu0 0
        %902 = vmatpush.bf16.msra.mxu0 0
        %903 = vmatpush.bf16.msra.mxu0 0
        %904 = vmatpush.bf16.msra.mxu0 0
        %905 = vmatpush.bf16.msra.mxu0 %v893
        %906 = vmatpush.bf16.msra.mxu0 %v892
        %907 = vmatmul.bf16.gmra.mxu0 %v897
        %v908 = vpop.f32.mrf.mxu0
        %v909 = vadd.f32 %v880, %v908
        %v910 = vpop.f32.mrf.mxu0
        %v911 = vadd.f32 %v882, %v910
        %912 = vdwg.mxu0
        %913 = vrot.lane.b32.xlu0 %v710, 64
        %v914 = vpop.permute.xlu0 %913
        %915 = vrot.lane.b32.xlu0 %v711, 64
        %v916 = vpop.permute.xlu0 %915
        %v918 = vsel %vm713, %v914, 0
        %v921 = vsel %vm713, %v916, 0
        %923 = vmatpush.bf16.xpose.msra.mxu0 0
        %924 = vmatpush.bf16.xpose.msra.mxu0 0
        %925 = vmatpush.bf16.xpose.msra.mxu0 0
        %926 = vmatpush.bf16.xpose.msra.mxu0 0
        %927 = vmatpush.bf16.xpose.msra.mxu0 0
        %928 = vmatpush.bf16.xpose.msra.mxu0 0
        %929 = vmatpush.bf16.xpose.msra.mxu0 0
        %930 = vmatpush.bf16.xpose.msra.mxu0 %v921
        %931 = vmatmul.bf16.gmra.mxu0 %v918
        %v932 = vpop.f32.mrf.mxu0
        %v933 = vadd.f32 %v708, %v932
        %v934 = vpop.f32.mrf.mxu0
        %v935 = vadd.f32 %v709, %v934
        %936 = vdwg.mxu0
        %v937 = vsel %vm734, %v933, -inf
        %938 = vmax.xlane.f32.xlu0 %v937
        %v939 = vpop.xlane.xlu0 %938
        %v940 = vsel %vm734, %v935, -inf
        %941 = vmax.xlane.f32.xlu0 %v940
        %v942 = vpop.xlane.xlu0 %941
        %v943 = vsub.f32 %v933, %v939
        %v944 = vsub.f32 %v935, %v942
        %v945 = vmul.f32 %v943, 1.442695
        %v946 = vpow.pop %v945
        %v947 = vmul.f32 %v944, 1.442695
        %v948 = vpow.pop %v947
        %v949 = vsel %vm734, %v946, 0.0
        %950 = vadd.xlane.f32.xlu0 %v949
        %v951 = vpop.xlane.xlu0 %950
        %v952 = vsel %vm734, %v948, 0.0
        %953 = vadd.xlane.f32.xlu0 %v952
        %v954 = vpop.xlane.xlu0 %953
        %v955 = vrcp.pop %v951
        %v956 = vrcp.pop %v954
        %v957 = vmul.f32 %v946, %v955
        %v958 = vmul.f32 %v948, %v956
        %v959 = vpack.c.bf16 %v958, %v957
        %960 = vrot.lane.b32.xlu0 %v712, 64
        %v961 = vpop.permute.xlu0 %960
        %v964 = vsel %vm734, %v959, 0
        %966 = vmatpush.bf16.msra.mxu0 0
        %967 = vmatpush.bf16.msra.mxu0 0
        %968 = vmatpush.bf16.msra.mxu0 0
        %969 = vmatpush.bf16.msra.mxu0 0
        %970 = vmatpush.bf16.msra.mxu0 0
        %971 = vmatpush.bf16.msra.mxu0 0
        %972 = vmatpush.bf16.msra.mxu0 0
        %973 = vmatpush.bf16.msra.mxu0 %v961
        %974 = vmatmul.bf16.gmra.mxu0 %v964
        %v975 = vpop.f32.mrf.mxu0
        %v976 = vadd.f32 0.0, %v975
        %v977 = vpop.f32.mrf.mxu0
        %v978 = vadd.f32 0.0, %v977
        %979 = vdwg.mxu0
        %v980 = vld [vmem:[%s357 + $0x10c] sm:$0xf]
        %v981 = vld [vmem:[%s357 + $0x12c] sm:$0xf]
        %v982 = vld [vmem:[%s357 + $0x14c] sm:$0xf]
        %v983 = vld [vmem:[%s357 + $0x16c] sm:$0xf]
        %v984 = vpack.c.bf16 %v978, %v976
        %v989 = vunpack.c.l.b16 %v980
        %v990 = vunpack.c.l.b16 %v981
        %v991 = vunpack.c.l.b16 %v982
        %v992 = vunpack.c.l.b16 %v983
        %v993 = vpack.c.b16 %v990, %v989
        %v994 = vpack.c.b16 %v992, %v991
        %v998 = vsel %vm713, %v984, 0
        %1000 = vmatpush.bf16.msra.mxu0 0
        %1001 = vmatpush.bf16.msra.mxu0 0
        %1002 = vmatpush.bf16.msra.mxu0 0
        %1003 = vmatpush.bf16.msra.mxu0 0
        %1004 = vmatpush.bf16.msra.mxu0 0
        %1005 = vmatpush.bf16.msra.mxu0 0
        %1006 = vmatpush.bf16.msra.mxu0 %v994
        %1007 = vmatpush.bf16.msra.mxu0 %v993
        %1008 = vmatmul.bf16.gmra.mxu0 %v998
        %v1009 = vpop.f32.mrf.mxu0
        %v1010 = vadd.f32 0.0, %v1009
        %v1011 = vpop.f32.mrf.mxu0
        %v1012 = vadd.f32 0.0, %v1011
        %1013 = vdwg.mxu0
        %v1014 = vadd.f32 %v909, %v1010
        %v1015 = vadd.f32 %v911, %v1012
        %1016 = vrot.lane.b32.xlu0 %v710, 32
        %v1017 = vpop.permute.xlu0 %1016
        %1018 = vrot.lane.b32.xlu0 %v711, 32
        %v1019 = vpop.permute.xlu0 %1018
        %v1021 = vsel %vm713, %v1017, 0
        %v1024 = vsel %vm713, %v1019, 0
        %1026 = vmatpush.bf16.xpose.msra.mxu0 0
        %1027 = vmatpush.bf16.xpose.msra.mxu0 0
        %1028 = vmatpush.bf16.xpose.msra.mxu0 0
        %1029 = vmatpush.bf16.xpose.msra.mxu0 0
        %1030 = vmatpush.bf16.xpose.msra.mxu0 0
        %1031 = vmatpush.bf16.xpose.msra.mxu0 0
        %1032 = vmatpush.bf16.xpose.msra.mxu0 0
        %1033 = vmatpush.bf16.xpose.msra.mxu0 %v1024
        %1034 = vmatmul.bf16.gmra.mxu0 %v1021
        %v1035 = vpop.f32.mrf.mxu0
        %v1036 = vadd.f32 %v708, %v1035
        %v1037 = vpop.f32.mrf.mxu0
        %v1038 = vadd.f32 %v709, %v1037
        %1039 = vdwg.mxu0
        %v1040 = vsel %vm734, %v1036, -inf
        %1041 = vmax.xlane.f32.xlu0 %v1040
        %v1042 = vpop.xlane.xlu0 %1041
        %v1043 = vsel %vm734, %v1038, -inf
        %1044 = vmax.xlane.f32.xlu0 %v1043
        %v1045 = vpop.xlane.xlu0 %1044
        %v1046 = vsub.f32 %v1036, %v1042
        %v1047 = vsub.f32 %v1038, %v1045
        %v1048 = vmul.f32 %v1046, 1.442695
        %v1049 = vpow.pop %v1048
        %v1050 = vmul.f32 %v1047, 1.442695
        %v1051 = vpow.pop %v1050
        %v1052 = vsel %vm734, %v1049, 0.0
        %1053 = vadd.xlane.f32.xlu0 %v1052
        %v1054 = vpop.xlane.xlu0 %1053
        %v1055 = vsel %vm734, %v1051, 0.0
        %1056 = vadd.xlane.f32.xlu0 %v1055
        %v1057 = vpop.xlane.xlu0 %1056
        %v1058 = vrcp.pop %v1054
        %v1059 = vrcp.pop %v1057
        %v1060 = vmul.f32 %v1049, %v1058
        %v1061 = vmul.f32 %v1051, %v1059
        %v1062 = vpack.c.bf16 %v1061, %v1060
        %1063 = vrot.lane.b32.xlu0 %v712, 32
        %v1064 = vpop.permute.xlu0 %1063
        %v1067 = vsel %vm734, %v1062, 0
        %1069 = vmatpush.bf16.msra.mxu0 0
        %1070 = vmatpush.bf16.msra.mxu0 0
        %1071 = vmatpush.bf16.msra.mxu0 0
        %1072 = vmatpush.bf16.msra.mxu0 0
        %1073 = vmatpush.bf16.msra.mxu0 0
        %1074 = vmatpush.bf16.msra.mxu0 0
        %1075 = vmatpush.bf16.msra.mxu0 0
        %1076 = vmatpush.bf16.msra.mxu0 %v1064
        %1077 = vmatmul.bf16.gmra.mxu0 %v1067
        %v1078 = vpop.f32.mrf.mxu0
        %v1079 = vadd.f32 0.0, %v1078
        %v1080 = vpop.f32.mrf.mxu0
        %v1081 = vadd.f32 0.0, %v1080
        %1082 = vdwg.mxu0
        %v1083 = vld [vmem:[%s357 + $0x18c] sm:$0xf]
        %v1084 = vld [vmem:[%s357 + $0x1ac] sm:$0xf]
        %v1085 = vld [vmem:[%s357 + $0x1cc] sm:$0xf]
        %v1086 = vld [vmem:[%s357 + $0x1ec] sm:$0xf]
        %v1087 = vpack.c.bf16 %v1081, %v1079
        %v1092 = vunpack.c.l.b16 %v1083
        %v1093 = vunpack.c.l.b16 %v1084
        %v1094 = vunpack.c.l.b16 %v1085
        %v1095 = vunpack.c.l.b16 %v1086
        %v1096 = vpack.c.b16 %v1093, %v1092
        %v1097 = vpack.c.b16 %v1095, %v1094
        %v1101 = vsel %vm713, %v1087, 0
        %1103 = vmatpush.bf16.msra.mxu0 0
        %1104 = vmatpush.bf16.msra.mxu0 0
        %1105 = vmatpush.bf16.msra.mxu0 0
        %1106 = vmatpush.bf16.msra.mxu0 0
        %1107 = vmatpush.bf16.msra.mxu0 0
        %1108 = vmatpush.bf16.msra.mxu0 0
        %1109 = vmatpush.bf16.msra.mxu0 %v1097
        %1110 = vmatpush.bf16.msra.mxu0 %v1096
        %1111 = vmatmul.bf16.gmra.mxu0 %v1101
        %v1112 = vpop.f32.mrf.mxu0
        %v1113 = vadd.f32 0.0, %v1112
        %v1114 = vpop.f32.mrf.mxu0
        %v1115 = vadd.f32 0.0, %v1114
        %1116 = vdwg.mxu0
        %v1117 = vadd.f32 %v1014, %v1113
        %v1118 = vadd.f32 %v1015, %v1115
        %v1119 = vld [vmem:[%s387 + $0x3] sm:$0x1]
        %v1121 = vperm.slane %v1119, 0
        %v1123 = vadd.f32 %v1117, %v1121
        %v1124 = vadd.f32 %v1118, %v1121
        %v1125 = vld [vmem:[%s377 + $0x2] sm:$0x1]
        %v1126 = vld [vmem:[%s377 + $0x3] sm:$0x1]
        %1127 = vadd.xlane.f32.xlu0 %v1123
        %v1128 = vpop.xlane.xlu0 %1127
        %1129 = vadd.xlane.f32.xlu0 %v1124
        %v1130 = vpop.xlane.xlu0 %1129
        %v1131 = vmul.f32 %v1128, %v452
        %v1132 = vmul.f32 %v1130, %v452
        %v1133 = vsub.f32 %v1123, %v1131
        %v1134 = vsub.f32 %v1124, %v1132
        %v1135 = vmul.f32 %v1133, %v1133
        %v1136 = vmul.f32 %v1134, %v1134
        %1137 = vadd.xlane.f32.xlu0 %v1135
        %v1138 = vpop.xlane.xlu0 %1137
        %1139 = vadd.xlane.f32.xlu0 %v1136
        %v1140 = vpop.xlane.xlu0 %1139
        %v1141 = vmul.f32 %v1138, %v452
        %v1142 = vmul.f32 %v1140, %v452
        %v1143 = vadd.f32 %v1141, 1e-05
        %v1144 = vadd.f32 %v1142, 1e-05
        %v1145 = vrsqrt.pop %v1143
        %v1146 = vmul.f32 %v1145, %v1143
        %v1147 = vmul.f32 %v1146, %v1145
        %v1148 = vmul.f32 0.5, %v1147
        %v1149 = vsub.f32 1.5, %v1148
        %v1150 = vmul.f32 %v1145, %v1149
        %vm1151 = vweird.f32 %v1143
        %vm1152 = vweird.f32 %v1145
        %vm1153 = vmor %vm1151, %vm1152
        %v1154 = vsel %vm1153, %v1145, %v1150
        %v1155 = vrsqrt.pop %v1144
        %v1156 = vmul.f32 %v1155, %v1144
        %v1157 = vmul.f32 %v1156, %v1155
        %v1158 = vmul.f32 0.5, %v1157
        %v1159 = vsub.f32 1.5, %v1158
        %v1160 = vmul.f32 %v1155, %v1159
        %vm1161 = vweird.f32 %v1144
        %vm1162 = vweird.f32 %v1155
        %vm1163 = vmor %vm1161, %vm1162
        %v1164 = vsel %vm1163, %v1155, %v1160
        %v1165 = vmul.f32 %v1133, %v1154
        %v1166 = vmul.f32 %v1134, %v1164
        %v1167 = vperm.slane %v1125, 0
        %v1168 = vmul.f32 %v1165, %v1167
        %v1169 = vmul.f32 %v1166, %v1167
        %v1170 = vperm.slane %v1126, 0
        %v1171 = vadd.f32 %v1168, %v1170
        %v1172 = vadd.f32 %v1169, %v1170
        %v1173 = vadd.f32 %v438, %v1171
        %v1174 = vadd.f32 %v439, %v1172
        %v1175 = vld [vmem:[%s377 + $0x4] sm:$0x1]
        %v1176 = vld [vmem:[%s377 + $0x5] sm:$0x1]
        %1177 = vadd.xlane.f32.xlu0 %v1173
        %v1178 = vpop.xlane.xlu0 %1177
        %1179 = vadd.xlane.f32.xlu0 %v1174
        %v1180 = vpop.xlane.xlu0 %1179
        %v1181 = vmul.f32 %v1178, %v452
        %v1182 = vmul.f32 %v1180, %v452
        %v1183 = vsub.f32 %v1173, %v1181
        %v1184 = vsub.f32 %v1174, %v1182
        %v1185 = vmul.f32 %v1183, %v1183
        %v1186 = vmul.f32 %v1184, %v1184
        %1187 = vadd.xlane.f32.xlu0 %v1185
        %v1188 = vpop.xlane.xlu0 %1187
        %1189 = vadd.xlane.f32.xlu0 %v1186
        %v1190 = vpop.xlane.xlu0 %1189
        %v1191 = vmul.f32 %v1188, %v452
        %v1192 = vmul.f32 %v1190, %v452
        %v1193 = vadd.f32 %v1191, 1e-05
        %v1194 = vadd.f32 %v1192, 1e-05
        %v1195 = vrsqrt.pop %v1193
        %v1196 = vmul.f32 %v1195, %v1193
        %v1197 = vmul.f32 %v1196, %v1195
        %v1198 = vmul.f32 0.5, %v1197
        %v1199 = vsub.f32 1.5, %v1198
        %v1200 = vmul.f32 %v1195, %v1199
        %vm1201 = vweird.f32 %v1193
        %vm1202 = vweird.f32 %v1195
        %vm1203 = vmor %vm1201, %vm1202
        %v1204 = vsel %vm1203, %v1195, %v1200
        %v1205 = vrsqrt.pop %v1194
        %v1206 = vmul.f32 %v1205, %v1194
        %v1207 = vmul.f32 %v1206, %v1205
        %v1208 = vmul.f32 0.5, %v1207
        %v1209 = vsub.f32 1.5, %v1208
        %v1210 = vmul.f32 %v1205, %v1209
        %vm1211 = vweird.f32 %v1194
        %vm1212 = vweird.f32 %v1205
        %vm1213 = vmor %vm1211, %vm1212
        %v1214 = vsel %vm1213, %v1205, %v1210
        %v1215 = vmul.f32 %v1183, %v1204
        %v1216 = vmul.f32 %v1184, %v1214
        %v1217 = vperm.slane %v1175, 0
        %v1218 = vmul.f32 %v1215, %v1217
        %v1219 = vmul.f32 %v1216, %v1217
        %v1220 = vperm.slane %v1176, 0
        %v1221 = vadd.f32 %v1218, %v1220
        %v1222 = vadd.f32 %v1219, %v1220
        %v1223 = vpack.c.bf16 %v1222, %v1221
        %v1224 = vld [vmem:[%s357 + $0x10] sm:$0xff]
        %v1225 = vld [vmem:[%s357 + $0x18] sm:$0xff]
        %v1226 = vld [vmem:[%s357 + $0x30] sm:$0xff]
        %v1227 = vld [vmem:[%s357 + $0x38] sm:$0xff]
        %v1228 = vld [vmem:[%s357 + $0x50] sm:$0xff]
        %v1229 = vld [vmem:[%s357 + $0x58] sm:$0xff]
        %v1230 = vld [vmem:[%s357 + $0x70] sm:$0xff]
        %v1231 = vld [vmem:[%s357 + $0x78] sm:$0xff]
        %v1232 = vld [vmem:[%s357 + $0x90] sm:$0xff]
        %v1233 = vld [vmem:[%s357 + $0x98] sm:$0xff]
        %v1234 = vld [vmem:[%s357 + $0xb0] sm:$0xff]
        %v1235 = vld [vmem:[%s357 + $0xb8] sm:$0xff]
        %v1236 = vld [vmem:[%s357 + $0xd0] sm:$0xff]
        %v1237 = vld [vmem:[%s357 + $0xd8] sm:$0xff]
        %v1238 = vld [vmem:[%s357 + $0xf0] sm:$0xff]
        %v1239 = vld [vmem:[%s357 + $0xf8] sm:$0xff]
        %v1240 = vld [vmem:[%s357 + $0x110] sm:$0xff]
        %v1241 = vld [vmem:[%s357 + $0x118] sm:$0xff]
        %v1242 = vld [vmem:[%s357 + $0x130] sm:$0xff]
        %v1243 = vld [vmem:[%s357 + $0x138] sm:$0xff]
        %v1244 = vld [vmem:[%s357 + $0x150] sm:$0xff]
        %v1245 = vld [vmem:[%s357 + $0x158] sm:$0xff]
        %v1246 = vld [vmem:[%s357 + $0x170] sm:$0xff]
        %v1247 = vld [vmem:[%s357 + $0x178] sm:$0xff]
        %v1248 = vld [vmem:[%s357 + $0x190] sm:$0xff]
        %v1249 = vld [vmem:[%s357 + $0x198] sm:$0xff]
        %v1250 = vld [vmem:[%s357 + $0x1b0] sm:$0xff]
        %v1251 = vld [vmem:[%s357 + $0x1b8] sm:$0xff]
        %v1252 = vld [vmem:[%s357 + $0x1d0] sm:$0xff]
        %v1253 = vld [vmem:[%s357 + $0x1d8] sm:$0xff]
        %v1254 = vld [vmem:[%s357 + $0x1f0] sm:$0xff]
        %v1255 = vld [vmem:[%s357 + $0x1f8] sm:$0xff]
        %v1256 = vld [vmem:[%s387 + $0x4] sm:$0xf]
        %v1258 = vperm.slane %v1256, 0
        %v1259 = vperm.slane %v1256, 1
        %v1260 = vperm.slane %v1256, 2
        %v1261 = vperm.slane %v1256, 3
        %v1298 = vunpack.c.l.b16 %v1224
        %v1299 = vunpack.c.h.b16 %v1224
        %v1300 = vunpack.c.l.b16 %v1225
        %v1301 = vunpack.c.h.b16 %v1225
        %v1302 = vunpack.c.l.b16 %v1226
        %v1303 = vunpack.c.h.b16 %v1226
        %v1304 = vunpack.c.l.b16 %v1227
        %v1305 = vunpack.c.h.b16 %v1227
        %v1306 = vunpack.c.l.b16 %v1228
        %v1307 = vunpack.c.h.b16 %v1228
        %v1308 = vunpack.c.l.b16 %v1229
        %v1309 = vunpack.c.h.b16 %v1229
        %v1310 = vunpack.c.l.b16 %v1230
        %v1311 = vunpack.c.h.b16 %v1230
        %v1312 = vunpack.c.l.b16 %v1231
        %v1313 = vunpack.c.h.b16 %v1231
        %v1314 = vunpack.c.l.b16 %v1232
        %v1315 = vunpack.c.h.b16 %v1232
        %v1316 = vunpack.c.l.b16 %v1233
        %v1317 = vunpack.c.h.b16 %v1233
        %v1318 = vunpack.c.l.b16 %v1234
        %v1319 = vunpack.c.h.b16 %v1234
        %v1320 = vunpack.c.l.b16 %v1235
        %v1321 = vunpack.c.h.b16 %v1235
        %v1322 = vunpack.c.l.b16 %v1236
        %v1323 = vunpack.c.h.b16 %v1236
        %v1324 = vunpack.c.l.b16 %v1237
        %v1325 = vunpack.c.h.b16 %v1237
        %v1326 = vunpack.c.l.b16 %v1238
        %v1327 = vunpack.c.h.b16 %v1238
        %v1328 = vunpack.c.l.b16 %v1239
        %v1329 = vunpack.c.h.b16 %v1239
        %v1330 = vunpack.c.l.b16 %v1240
        %v1331 = vunpack.c.h.b16 %v1240
        %v1332 = vunpack.c.l.b16 %v1241
        %v1333 = vunpack.c.h.b16 %v1241
        %v1334 = vunpack.c.l.b16 %v1242
        %v1335 = vunpack.c.h.b16 %v1242
        %v1336 = vunpack.c.l.b16 %v1243
        %v1337 = vunpack.c.h.b16 %v1243
        %v1338 = vunpack.c.l.b16 %v1244
        %v1339 = vunpack.c.h.b16 %v1244
        %v1340 = vunpack.c.l.b16 %v1245
        %v1341 = vunpack.c.h.b16 %v1245
        %v1342 = vunpack.c.l.b16 %v1246
        %v1343 = vunpack.c.h.b16 %v1246
        %v1344 = vunpack.c.l.b16 %v1247
        %v1345 = vunpack.c.h.b16 %v1247
        %v1346 = vunpack.c.l.b16 %v1248
        %v1347 = vunpack.c.h.b16 %v1248
        %v1348 = vunpack.c.l.b16 %v1249
        %v1349 = vunpack.c.h.b16 %v1249
        %v1350 = vunpack.c.l.b16 %v1250
        %v1351 = vunpack.c.h.b16 %v1250
        %v1352 = vunpack.c.l.b16 %v1251
        %v1353 = vunpack.c.h.b16 %v1251
        %v1354 = vunpack.c.l.b16 %v1252
        %v1355 = vunpack.c.h.b16 %v1252
        %v1356 = vunpack.c.l.b16 %v1253
        %v1357 = vunpack.c.h.b16 %v1253
        %v1358 = vunpack.c.l.b16 %v1254
        %v1359 = vunpack.c.h.b16 %v1254
        %v1360 = vunpack.c.l.b16 %v1255
        %v1361 = vunpack.c.h.b16 %v1255
        %v1362 = vpack.c.b16 %v1302, %v1298
        %v1363 = vpack.c.b16 %v1303, %v1299
        %v1364 = vpack.c.b16 %v1304, %v1300
        %v1365 = vpack.c.b16 %v1305, %v1301
        %v1366 = vpack.c.b16 %v1310, %v1306
        %v1367 = vpack.c.b16 %v1311, %v1307
        %v1368 = vpack.c.b16 %v1312, %v1308
        %v1369 = vpack.c.b16 %v1313, %v1309
        %v1370 = vpack.c.b16 %v1318, %v1314
        %v1371 = vpack.c.b16 %v1319, %v1315
        %v1372 = vpack.c.b16 %v1320, %v1316
        %v1373 = vpack.c.b16 %v1321, %v1317
        %v1374 = vpack.c.b16 %v1326, %v1322
        %v1375 = vpack.c.b16 %v1327, %v1323
        %v1376 = vpack.c.b16 %v1328, %v1324
        %v1377 = vpack.c.b16 %v1329, %v1325
        %v1378 = vpack.c.b16 %v1334, %v1330
        %v1379 = vpack.c.b16 %v1335, %v1331
        %v1380 = vpack.c.b16 %v1336, %v1332
        %v1381 = vpack.c.b16 %v1337, %v1333
        %v1382 = vpack.c.b16 %v1342, %v1338
        %v1383 = vpack.c.b16 %v1343, %v1339
        %v1384 = vpack.c.b16 %v1344, %v1340
        %v1385 = vpack.c.b16 %v1345, %v1341
        %v1386 = vpack.c.b16 %v1350, %v1346
        %v1387 = vpack.c.b16 %v1351, %v1347
        %v1388 = vpack.c.b16 %v1352, %v1348
        %v1389 = vpack.c.b16 %v1353, %v1349
        %v1390 = vpack.c.b16 %v1358, %v1354
        %v1391 = vpack.c.b16 %v1359, %v1355
        %v1392 = vpack.c.b16 %v1360, %v1356
        %v1393 = vpack.c.b16 %v1361, %v1357
        %1426 = vmatpush.bf16.msra.mxu0 %v1390
        %1427 = vmatpush.bf16.msra.mxu0 %v1386
        %1428 = vmatpush.bf16.msra.mxu0 %v1382
        %1429 = vmatpush.bf16.msra.mxu0 %v1378
        %1430 = vmatpush.bf16.msra.mxu0 %v1374
        %1431 = vmatpush.bf16.msra.mxu0 %v1370
        %1432 = vmatpush.bf16.msra.mxu0 %v1366
        %1433 = vmatpush.bf16.msra.mxu0 %v1362
        %1434 = vmatmul.bf16.gmra.mxu0 %v1223
        %v1435 = vpop.f32.mrf.mxu0
        %v1436 = vadd.f32 %v1258, %v1435
        %v1437 = vpop.f32.mrf.mxu0
        %v1438 = vadd.f32 %v1258, %v1437
        %1439 = vdwg.mxu0
        %1440 = vmatpush.bf16.msra.mxu0 %v1391
        %1441 = vmatpush.bf16.msra.mxu0 %v1387
        %1442 = vmatpush.bf16.msra.mxu0 %v1383
        %1443 = vmatpush.bf16.msra.mxu0 %v1379
        %1444 = vmatpush.bf16.msra.mxu0 %v1375
        %1445 = vmatpush.bf16.msra.mxu0 %v1371
        %1446 = vmatpush.bf16.msra.mxu0 %v1367
        %1447 = vmatpush.bf16.msra.mxu0 %v1363
        %1448 = vmatmul.bf16.gmra.mxu0 %v1223
        %v1449 = vpop.f32.mrf.mxu0
        %v1450 = vadd.f32 %v1259, %v1449
        %v1451 = vpop.f32.mrf.mxu0
        %v1452 = vadd.f32 %v1259, %v1451
        %1453 = vdwg.mxu0
        %1454 = vmatpush.bf16.msra.mxu0 %v1392
        %1455 = vmatpush.bf16.msra.mxu0 %v1388
        %1456 = vmatpush.bf16.msra.mxu0 %v1384
        %1457 = vmatpush.bf16.msra.mxu0 %v1380
        %1458 = vmatpush.bf16.msra.mxu0 %v1376
        %1459 = vmatpush.bf16.msra.mxu0 %v1372
        %1460 = vmatpush.bf16.msra.mxu0 %v1368
        %1461 = vmatpush.bf16.msra.mxu0 %v1364
        %1462 = vmatmul.bf16.gmra.mxu0 %v1223
        %v1463 = vpop.f32.mrf.mxu0
        %v1464 = vadd.f32 %v1260, %v1463
        %v1465 = vpop.f32.mrf.mxu0
        %v1466 = vadd.f32 %v1260, %v1465
        %1467 = vdwg.mxu0
        %1468 = vmatpush.bf16.msra.mxu0 %v1393
        %1469 = vmatpush.bf16.msra.mxu0 %v1389
        %1470 = vmatpush.bf16.msra.mxu0 %v1385
        %1471 = vmatpush.bf16.msra.mxu0 %v1381
        %1472 = vmatpush.bf16.msra.mxu0 %v1377
        %1473 = vmatpush.bf16.msra.mxu0 %v1373
        %1474 = vmatpush.bf16.msra.mxu0 %v1369
        %1475 = vmatpush.bf16.msra.mxu0 %v1365
        %1476 = vmatmul.bf16.gmra.mxu0 %v1223
        %v1477 = vpop.f32.mrf.mxu0
        %v1478 = vadd.f32 %v1261, %v1477
        %v1479 = vpop.f32.mrf.mxu0
        %v1480 = vadd.f32 %v1261, %v1479
        %1481 = vdwg.mxu0
        %v1482 = vmax.f32 %v1436, 0.0
        %v1483 = vmax.f32 %v1450, 0.0
        %v1484 = vmax.f32 %v1464, 0.0
        %v1485 = vmax.f32 %v1478, 0.0
        %v1486 = vmax.f32 %v1438, 0.0
        %v1487 = vmax.f32 %v1452, 0.0
        %v1488 = vmax.f32 %v1466, 0.0
        %v1489 = vmax.f32 %v1480, 0.0
        %v1490 = vpack.c.bf16 %v1486, %v1482
        %v1491 = vpack.c.bf16 %v1487, %v1483
        %v1492 = vpack.c.bf16 %v1488, %v1484
        %v1493 = vpack.c.bf16 %v1489, %v1485
        %v1494 = vld [vmem:[%s367] sm:$0xf]
        %v1495 = vld [vmem:[%s367 + $0x4] sm:$0xf]
        %v1496 = vld [vmem:[%s367 + $0x8] sm:$0xf]
        %v1497 = vld [vmem:[%s367 + $0xc] sm:$0xf]
        %v1498 = vld [vmem:[%s367 + $0x10] sm:$0xf]
        %v1499 = vld [vmem:[%s367 + $0x14] sm:$0xf]
        %v1500 = vld [vmem:[%s367 + $0x18] sm:$0xf]
        %v1501 = vld [vmem:[%s367 + $0x1c] sm:$0xf]
        %v1502 = vld [vmem:[%s367 + $0x20] sm:$0xf]
        %v1503 = vld [vmem:[%s367 + $0x24] sm:$0xf]
        %v1504 = vld [vmem:[%s367 + $0x28] sm:$0xf]
        %v1505 = vld [vmem:[%s367 + $0x2c] sm:$0xf]
        %v1506 = vld [vmem:[%s367 + $0x30] sm:$0xf]
        %v1507 = vld [vmem:[%s367 + $0x34] sm:$0xf]
        %v1508 = vld [vmem:[%s367 + $0x38] sm:$0xf]
        %v1509 = vld [vmem:[%s367 + $0x3c] sm:$0xf]
        %v1510 = vld [vmem:[%s367 + $0x40] sm:$0xf]
        %v1511 = vld [vmem:[%s367 + $0x44] sm:$0xf]
        %v1512 = vld [vmem:[%s367 + $0x48] sm:$0xf]
        %v1513 = vld [vmem:[%s367 + $0x4c] sm:$0xf]
        %v1514 = vld [vmem:[%s367 + $0x50] sm:$0xf]
        %v1515 = vld [vmem:[%s367 + $0x54] sm:$0xf]
        %v1516 = vld [vmem:[%s367 + $0x58] sm:$0xf]
        %v1517 = vld [vmem:[%s367 + $0x5c] sm:$0xf]
        %v1518 = vld [vmem:[%s367 + $0x60] sm:$0xf]
        %v1519 = vld [vmem:[%s367 + $0x64] sm:$0xf]
        %v1520 = vld [vmem:[%s367 + $0x68] sm:$0xf]
        %v1521 = vld [vmem:[%s367 + $0x6c] sm:$0xf]
        %v1522 = vld [vmem:[%s367 + $0x70] sm:$0xf]
        %v1523 = vld [vmem:[%s367 + $0x74] sm:$0xf]
        %v1524 = vld [vmem:[%s367 + $0x78] sm:$0xf]
        %v1525 = vld [vmem:[%s367 + $0x7c] sm:$0xf]
        %v1526 = vld [vmem:[%s367 + $0x80] sm:$0xf]
        %v1527 = vld [vmem:[%s367 + $0x84] sm:$0xf]
        %v1528 = vld [vmem:[%s367 + $0x88] sm:$0xf]
        %v1529 = vld [vmem:[%s367 + $0x8c] sm:$0xf]
        %v1530 = vld [vmem:[%s367 + $0x90] sm:$0xf]
        %v1531 = vld [vmem:[%s367 + $0x94] sm:$0xf]
        %v1532 = vld [vmem:[%s367 + $0x98] sm:$0xf]
        %v1533 = vld [vmem:[%s367 + $0x9c] sm:$0xf]
        %v1534 = vld [vmem:[%s367 + $0xa0] sm:$0xf]
        %v1535 = vld [vmem:[%s367 + $0xa4] sm:$0xf]
        %v1536 = vld [vmem:[%s367 + $0xa8] sm:$0xf]
        %v1537 = vld [vmem:[%s367 + $0xac] sm:$0xf]
        %v1538 = vld [vmem:[%s367 + $0xb0] sm:$0xf]
        %v1539 = vld [vmem:[%s367 + $0xb4] sm:$0xf]
        %v1540 = vld [vmem:[%s367 + $0xb8] sm:$0xf]
        %v1541 = vld [vmem:[%s367 + $0xbc] sm:$0xf]
        %v1542 = vld [vmem:[%s367 + $0xc0] sm:$0xf]
        %v1543 = vld [vmem:[%s367 + $0xc4] sm:$0xf]
        %v1544 = vld [vmem:[%s367 + $0xc8] sm:$0xf]
        %v1545 = vld [vmem:[%s367 + $0xcc] sm:$0xf]
        %v1546 = vld [vmem:[%s367 + $0xd0] sm:$0xf]
        %v1547 = vld [vmem:[%s367 + $0xd4] sm:$0xf]
        %v1548 = vld [vmem:[%s367 + $0xd8] sm:$0xf]
        %v1549 = vld [vmem:[%s367 + $0xdc] sm:$0xf]
        %v1550 = vld [vmem:[%s367 + $0xe0] sm:$0xf]
        %v1551 = vld [vmem:[%s367 + $0xe4] sm:$0xf]
        %v1552 = vld [vmem:[%s367 + $0xe8] sm:$0xf]
        %v1553 = vld [vmem:[%s367 + $0xec] sm:$0xf]
        %v1554 = vld [vmem:[%s367 + $0xf0] sm:$0xf]
        %v1555 = vld [vmem:[%s367 + $0xf4] sm:$0xf]
        %v1556 = vld [vmem:[%s367 + $0xf8] sm:$0xf]
        %v1557 = vld [vmem:[%s367 + $0xfc] sm:$0xf]
        %v1558 = vld [vmem:[%s387 + $0x8] sm:$0x1]
        %v1560 = vperm.slane %v1558, 0
        %v1626 = vunpack.c.l.b16 %v1494
        %v1627 = vunpack.c.l.b16 %v1495
        %v1628 = vunpack.c.l.b16 %v1496
        %v1629 = vunpack.c.l.b16 %v1497
        %v1630 = vunpack.c.l.b16 %v1498
        %v1631 = vunpack.c.l.b16 %v1499
        %v1632 = vunpack.c.l.b16 %v1500
        %v1633 = vunpack.c.l.b16 %v1501
        %v1634 = vunpack.c.l.b16 %v1502
        %v1635 = vunpack.c.l.b16 %v1503
        %v1636 = vunpack.c.l.b16 %v1504
        %v1637 = vunpack.c.l.b16 %v1505
        %v1638 = vunpack.c.l.b16 %v1506
        %v1639 = vunpack.c.l.b16 %v1507
        %v1640 = vunpack.c.l.b16 %v1508
        %v1641 = vunpack.c.l.b16 %v1509
        %v1642 = vunpack.c.l.b16 %v1510
        %v1643 = vunpack.c.l.b16 %v1511
        %v1644 = vunpack.c.l.b16 %v1512
        %v1645 = vunpack.c.l.b16 %v1513
        %v1646 = vunpack.c.l.b16 %v1514
        %v1647 = vunpack.c.l.b16 %v1515
        %v1648 = vunpack.c.l.b16 %v1516
        %v1649 = vunpack.c.l.b16 %v1517
        %v1650 = vunpack.c.l.b16 %v1518
        %v1651 = vunpack.c.l.b16 %v1519
        %v1652 = vunpack.c.l.b16 %v1520
        %v1653 = vunpack.c.l.b16 %v1521
        %v1654 = vunpack.c.l.b16 %v1522
        %v1655 = vunpack.c.l.b16 %v1523
        %v1656 = vunpack.c.l.b16 %v1524
        %v1657 = vunpack.c.l.b16 %v1525
        %v1658 = vunpack.c.l.b16 %v1526
        %v1659 = vunpack.c.l.b16 %v1527
        %v1660 = vunpack.c.l.b16 %v1528
        %v1661 = vunpack.c.l.b16 %v1529
        %v1662 = vunpack.c.l.b16 %v1530
        %v1663 = vunpack.c.l.b16 %v1531
        %v1664 = vunpack.c.l.b16 %v1532
        %v1665 = vunpack.c.l.b16 %v1533
        %v1666 = vunpack.c.l.b16 %v1534
        %v1667 = vunpack.c.l.b16 %v1535
        %v1668 = vunpack.c.l.b16 %v1536
        %v1669 = vunpack.c.l.b16 %v1537
        %v1670 = vunpack.c.l.b16 %v1538
        %v1671 = vunpack.c.l.b16 %v1539
        %v1672 = vunpack.c.l.b16 %v1540
        %v1673 = vunpack.c.l.b16 %v1541
        %v1674 = vunpack.c.l.b16 %v1542
        %v1675 = vunpack.c.l.b16 %v1543
        %v1676 = vunpack.c.l.b16 %v1544
        %v1677 = vunpack.c.l.b16 %v1545
        %v1678 = vunpack.c.l.b16 %v1546
        %v1679 = vunpack.c.l.b16 %v1547
        %v1680 = vunpack.c.l.b16 %v1548
        %v1681 = vunpack.c.l.b16 %v1549
        %v1682 = vunpack.c.l.b16 %v1550
        %v1683 = vunpack.c.l.b16 %v1551
        %v1684 = vunpack.c.l.b16 %v1552
        %v1685 = vunpack.c.l.b16 %v1553
        %v1686 = vunpack.c.l.b16 %v1554
        %v1687 = vunpack.c.l.b16 %v1555
        %v1688 = vunpack.c.l.b16 %v1556
        %v1689 = vunpack.c.l.b16 %v1557
        %v1690 = vpack.c.b16 %v1627, %v1626
        %v1691 = vpack.c.b16 %v1629, %v1628
        %v1692 = vpack.c.b16 %v1631, %v1630
        %v1693 = vpack.c.b16 %v1633, %v1632
        %v1694 = vpack.c.b16 %v1635, %v1634
        %v1695 = vpack.c.b16 %v1637, %v1636
        %v1696 = vpack.c.b16 %v1639, %v1638
        %v1697 = vpack.c.b16 %v1641, %v1640
        %v1698 = vpack.c.b16 %v1643, %v1642
        %v1699 = vpack.c.b16 %v1645, %v1644
        %v1700 = vpack.c.b16 %v1647, %v1646
        %v1701 = vpack.c.b16 %v1649, %v1648
        %v1702 = vpack.c.b16 %v1651, %v1650
        %v1703 = vpack.c.b16 %v1653, %v1652
        %v1704 = vpack.c.b16 %v1655, %v1654
        %v1705 = vpack.c.b16 %v1657, %v1656
        %v1706 = vpack.c.b16 %v1659, %v1658
        %v1707 = vpack.c.b16 %v1661, %v1660
        %v1708 = vpack.c.b16 %v1663, %v1662
        %v1709 = vpack.c.b16 %v1665, %v1664
        %v1710 = vpack.c.b16 %v1667, %v1666
        %v1711 = vpack.c.b16 %v1669, %v1668
        %v1712 = vpack.c.b16 %v1671, %v1670
        %v1713 = vpack.c.b16 %v1673, %v1672
        %v1714 = vpack.c.b16 %v1675, %v1674
        %v1715 = vpack.c.b16 %v1677, %v1676
        %v1716 = vpack.c.b16 %v1679, %v1678
        %v1717 = vpack.c.b16 %v1681, %v1680
        %v1718 = vpack.c.b16 %v1683, %v1682
        %v1719 = vpack.c.b16 %v1685, %v1684
        %v1720 = vpack.c.b16 %v1687, %v1686
        %v1721 = vpack.c.b16 %v1689, %v1688
        %1754 = vmatpush.bf16.msra.mxu0 %v1697
        %1755 = vmatpush.bf16.msra.mxu0 %v1696
        %1756 = vmatpush.bf16.msra.mxu0 %v1695
        %1757 = vmatpush.bf16.msra.mxu0 %v1694
        %1758 = vmatpush.bf16.msra.mxu0 %v1693
        %1759 = vmatpush.bf16.msra.mxu0 %v1692
        %1760 = vmatpush.bf16.msra.mxu0 %v1691
        %1761 = vmatpush.bf16.msra.mxu0 %v1690
        %1762 = vmatmul.bf16.gmra.mxu0 %v1490
        %v1763 = vpop.f32.mrf.mxu0
        %v1764 = vadd.f32 %v1560, %v1763
        %v1765 = vpop.f32.mrf.mxu0
        %v1766 = vadd.f32 %v1560, %v1765
        %1767 = vdwg.mxu0
        %1768 = vmatpush.bf16.msra.mxu0 %v1705
        %1769 = vmatpush.bf16.msra.mxu0 %v1704
        %1770 = vmatpush.bf16.msra.mxu0 %v1703
        %1771 = vmatpush.bf16.msra.mxu0 %v1702
        %1772 = vmatpush.bf16.msra.mxu0 %v1701
        %1773 = vmatpush.bf16.msra.mxu0 %v1700
        %1774 = vmatpush.bf16.msra.mxu0 %v1699
        %1775 = vmatpush.bf16.msra.mxu0 %v1698
        %1776 = vmatmul.bf16.gmra.mxu0 %v1491
        %v1777 = vpop.f32.mrf.mxu0
        %v1778 = vadd.f32 %v1764, %v1777
        %v1779 = vpop.f32.mrf.mxu0
        %v1780 = vadd.f32 %v1766, %v1779
        %1781 = vdwg.mxu0
        %1782 = vmatpush.bf16.msra.mxu0 %v1713
        %1783 = vmatpush.bf16.msra.mxu0 %v1712
        %1784 = vmatpush.bf16.msra.mxu0 %v1711
        %1785 = vmatpush.bf16.msra.mxu0 %v1710
        %1786 = vmatpush.bf16.msra.mxu0 %v1709
        %1787 = vmatpush.bf16.msra.mxu0 %v1708
        %1788 = vmatpush.bf16.msra.mxu0 %v1707
        %1789 = vmatpush.bf16.msra.mxu0 %v1706
        %1790 = vmatmul.bf16.gmra.mxu0 %v1492
        %v1791 = vpop.f32.mrf.mxu0
        %v1792 = vadd.f32 %v1778, %v1791
        %v1793 = vpop.f32.mrf.mxu0
        %v1794 = vadd.f32 %v1780, %v1793
        %1795 = vdwg.mxu0
        %1796 = vmatpush.bf16.msra.mxu0 %v1721
        %1797 = vmatpush.bf16.msra.mxu0 %v1720
        %1798 = vmatpush.bf16.msra.mxu0 %v1719
        %1799 = vmatpush.bf16.msra.mxu0 %v1718
        %1800 = vmatpush.bf16.msra.mxu0 %v1717
        %1801 = vmatpush.bf16.msra.mxu0 %v1716
        %1802 = vmatpush.bf16.msra.mxu0 %v1715
        %1803 = vmatpush.bf16.msra.mxu0 %v1714
        %1804 = vmatmul.bf16.gmra.mxu0 %v1493
        %v1805 = vpop.f32.mrf.mxu0
        %v1806 = vadd.f32 %v1792, %v1805
        %v1807 = vpop.f32.mrf.mxu0
        %v1808 = vadd.f32 %v1794, %v1807
        %1809 = vdwg.mxu0
        %v1810 = vld [vmem:[%s377 + $0x6] sm:$0x1]
        %v1811 = vld [vmem:[%s377 + $0x7] sm:$0x1]
        %1812 = vadd.xlane.f32.xlu0 %v1806
        %v1813 = vpop.xlane.xlu0 %1812
        %1814 = vadd.xlane.f32.xlu0 %v1808
        %v1815 = vpop.xlane.xlu0 %1814
        %v1816 = vmul.f32 %v1813, %v452
        %v1817 = vmul.f32 %v1815, %v452
        %v1818 = vsub.f32 %v1806, %v1816
        %v1819 = vsub.f32 %v1808, %v1817
        %v1820 = vmul.f32 %v1818, %v1818
        %v1821 = vmul.f32 %v1819, %v1819
        %1822 = vadd.xlane.f32.xlu0 %v1820
        %v1823 = vpop.xlane.xlu0 %1822
        %1824 = vadd.xlane.f32.xlu0 %v1821
        %v1825 = vpop.xlane.xlu0 %1824
        %v1826 = vmul.f32 %v1823, %v452
        %v1827 = vmul.f32 %v1825, %v452
        %v1828 = vadd.f32 %v1826, 1e-05
        %v1829 = vadd.f32 %v1827, 1e-05
        %v1830 = vrsqrt.pop %v1828
        %v1831 = vmul.f32 %v1830, %v1828
        %v1832 = vmul.f32 %v1831, %v1830
        %v1833 = vmul.f32 0.5, %v1832
        %v1834 = vsub.f32 1.5, %v1833
        %v1835 = vmul.f32 %v1830, %v1834
        %vm1836 = vweird.f32 %v1828
        %vm1837 = vweird.f32 %v1830
        %vm1838 = vmor %vm1836, %vm1837
        %v1839 = vsel %vm1838, %v1830, %v1835
        %v1840 = vrsqrt.pop %v1829
        %v1841 = vmul.f32 %v1840, %v1829
        %v1842 = vmul.f32 %v1841, %v1840
        %v1843 = vmul.f32 0.5, %v1842
        %v1844 = vsub.f32 1.5, %v1843
        %v1845 = vmul.f32 %v1840, %v1844
        %vm1846 = vweird.f32 %v1829
        %vm1847 = vweird.f32 %v1840
        %vm1848 = vmor %vm1846, %vm1847
        %v1849 = vsel %vm1848, %v1840, %v1845
        %v1850 = vmul.f32 %v1818, %v1839
        %v1851 = vmul.f32 %v1819, %v1849
        %v1852 = vperm.slane %v1810, 0
        %v1853 = vmul.f32 %v1850, %v1852
        %v1854 = vmul.f32 %v1851, %v1852
        %v1855 = vperm.slane %v1811, 0
        %v1856 = vadd.f32 %v1853, %v1855
        %v1857 = vadd.f32 %v1854, %v1855
        %v1858 = vadd.f32 %v1173, %v1856
        %v1859 = vadd.f32 %v1174, %v1857
        %1860 = vst [vmem:[#allocation2] sm:$0xff] %v1858
        %1861 = vst [vmem:[#allocation2 + $0x8] sm:$0xff] %v1859
        %p1862 = scmp.eq.s32.totalorder %s25, 1
        // Predicated region
        $region73: #{tpu_custom_call.1} parent=43 // pred_check
          %p1863 = pneg %p1862
        $region74: #{tpu_custom_call.1} parent=43 // pred_check_branch
          %1865 = sbr.rel (%p1863) target = $region76
        $region75: #{tpu_custom_call.1} parent=43 // pred_region
          %v1866 = vld [vmem:[#allocation2] sm:$0xff]
          %v1867 = vld [vmem:[#allocation2 + $0x8] sm:$0xff]
          %1868 = vst [vmem:[#allocation12] sm:$0xff] %v1866
          %1869 = vst [vmem:[#allocation12 + $0x8] sm:$0xff] %v1867
        $region76: #{tpu_custom_call.1} parent=43 // pred_fallthru
          _
        // Predicated region
        $region77: #{tpu_custom_call.1} parent=43 // pred_check
          %p1870 = pneg %p201
        $region78: #{tpu_custom_call.1} parent=43 // pred_check_branch
          %1872 = sbr.rel (%p1870) target = $region80
        $region79: #{tpu_custom_call.1} parent=43 // pred_region
          %s1873 = smul.u32 2, %s24
          %1875 = vsyncadd [#allocation5], 0
          %s1876 = smul.addr %s1873, 8
          %s1877 = scalar_lea.hbm %s6, %s1876
          %s1878 = sshll.u32 [#allocation12], 4
          %s1879 = int_to_ptr.vmem [resolvable:$true] %s1878
          %s1880 = sshll.u32 %s1877, 4
          %s1881 = int_to_ptr.hbm [resolvable:$true] %s1880
          %1886 = dma.vmem_to_hbm [thread:$0]  %s1879, 256, %s1881, [#allocation5], 128, 128, 8
        $region80: #{tpu_custom_call.1} parent=43 // pred_fallthru
          _
        // Predicated region
        $region81: #{tpu_custom_call.1} parent=43 // pred_check
          %p1887 = pneg %p201
        $region82: #{tpu_custom_call.1} parent=43 // pred_check_branch
          %1889 = sbr.rel (%p1887) target = $region84
        $region83: #{tpu_custom_call.1} parent=43 // pred_region
          %1891 = dma.done [#allocation5], 256
        $region84: #{tpu_custom_call.1} parent=43 // pred_fallthru
          _
      $region44: #{tpu_custom_call.1} parent=5 // pred_fallthru
        _
      %p1892 = scmp.le.s32.totalorder 2, %s15
      // Predicated region
      $region85: #{tpu_custom_call.1} parent=5 // pred_check
        %p1893 = pneg %p1892
      $region86: #{tpu_custom_call.1} parent=5 // pred_check_branch
        %1895 = sbr.rel (%p1893) target = $region88
      $region87: #{tpu_custom_call.1} parent=5 // pred_region
        %s1896 = ssub.s32 %s15, 2
      $region88: #{tpu_custom_call.1} parent=5 // pred_fallthru
        _
    $region6: #{tpu_custom_call.1} parent=1 // loop_footer
      %s19 = sadd.s32 1, %s15
    $region7: #{tpu_custom_call.1} parent=1 // loop_footer_branch
      %14 = sbr.rel target = $region3
    $region8: #{tpu_custom_call.1} parent=1 // loop_exit
      _
    %1897 = vsyncpa [#allocation4], 1
    %s1898 = scalar_lea.sflag [#allocation4], 1
    %1899 = vsyncpa %s1898, 1
    %1900 = vsyncpa [#allocation7], 1
    %1901 = vsyncpa [#allocation5], 1
    %s1902 = scalar_lea.sflag [#allocation5], 1
    %1903 = vsyncpa %s1902, 1

</llo_original>
